<compile_context>
chip_gen: v7x
topology: tpu7x:2x2x1
jax: 0.10.0
libtpu: 0.0.40
codegen_flags: <defaults>
</compile_context>

<pallas_src>
import jax
import jax.numpy as jnp
from jax import lax
from jax.experimental import pallas as pl
from jax.experimental.pallas import tpu as pltpu


def mlp_kernel(x_ref,
               w1_ref, b1_ref,
               w2_ref, b2_ref,
               w3_ref, b3_ref,
               w4_ref, b4_ref,
               w5_ref, b5_ref,
               o_ref):
    # x_ref: (tile_b, 6) native layout; w_i: (out_f, in_f); b_i: (out_f, 1);
    # o_ref: (1, tile_b) lane-dense output tile.
    #
    # Layer 1: contract feature dims of w1 (128, 6) and x (tile_b, 6)
    # -> (128, tile_b) feature-major, with the layout flip folded into the MXU op.
    h = lax.dot_general(w1_ref[...], x_ref[...],
                        dimension_numbers=(((1,), (1,)), ((), ())),
                        preferred_element_type=jnp.float32)
    h = jnp.maximum(h + b1_ref[...], 0.0)
    h = jnp.maximum(
        jnp.dot(w2_ref[...], h, preferred_element_type=jnp.float32) + b2_ref[...], 0.0)
    h = jnp.maximum(
        jnp.dot(w3_ref[...], h, preferred_element_type=jnp.float32) + b3_ref[...], 0.0)
    h = jnp.maximum(
        jnp.dot(w4_ref[...], h, preferred_element_type=jnp.float32) + b4_ref[...], 0.0)
    y = jnp.dot(w5_ref[...], h, preferred_element_type=jnp.float32) + b5_ref[...]
    o_ref[...] = y.astype(o_ref.dtype)
    # NOTE: splitting the lane dim into 2 sub-chunks (independent dep chains) is a
    # possible micro-opt if profiling shows MXU fill/drain latency binds; skipped.


def _default_tile_b(b128):
    """Pick tile_b (multiple of 128) given batch rounded up to 128."""
    if b128 <= 2048:
        # Small batch: one grid step (no megacore benefit on v5e/v6e; saves
        # per-step prologue/epilogue on a kernel that only runs a few us).
        return b128
    # Large batch: target >= 4 grid steps (2 per v7x TensorCore) with a
    # 1024..4096 tile so each step streams plenty of MXU column passes.
    tile = pl.cdiv(b128, 4)
    tile = pl.cdiv(tile, 128) * 128
    return max(1024, min(4096, tile))


def deep_model_forward(x, params, *, tile_b=None):
    """x: (B, 6) float32 (native PyTorch layout).  params: PyTorch-layout weights
    w_i (out_f, in_f) and biases b_i (out_f, 1).  Returns (B, 1) float32."""
    B, Din = x.shape
    assert Din == 6

    b128 = pl.cdiv(B, 128) * 128
    if tile_b is None:
        tile_b = _default_tile_b(b128)
    assert tile_b % 128 == 0, "tile_b must be a multiple of 128"

    # Pad batch rows (zeros) only if needed; results are sliced away below.
    b_pad = pl.cdiv(B, tile_b) * tile_b
    if b_pad != B:
        x = jnp.pad(x, ((0, b_pad - B), (0, 0)))
    grid = (b_pad // tile_b,)

    w1, b1 = params["w1"], params["b1"]
    w2, b2 = params["w2"], params["b2"]
    w3, b3 = params["w3"], params["b3"]
    w4, b4 = params["w4"], params["b4"]
    w5, b5 = params["w5"], params["b5"]

    # Weights/biases: full-array blocks, constant index map (fetched once).
    def rep(a):
        return pl.BlockSpec(a.shape, lambda i: (0, 0))

    in_specs = [
        # x tile in native layout: one contiguous ~tile_b*24 B DMA per step.
        pl.BlockSpec((tile_b, Din), lambda i: (i, 0)),
        rep(w1), rep(b1),
        rep(w2), rep(b2),
        rep(w3), rep(b3),
        rep(w4), rep(b4),
        rep(w5), rep(b5),
    ]
    # Output (1, b_pad) -> (1, tile_b) blocks: lane-dense, unmasked stores.
    out_spec = pl.BlockSpec((1, tile_b), lambda i: (0, i))

    out_t = pl.pallas_call(
        mlp_kernel,
        out_shape=jax.ShapeDtypeStruct((1, b_pad), jnp.float32),
        grid_spec=pltpu.PrefetchScalarGridSpec(
            num_scalar_prefetch=0,
            grid=grid,
            in_specs=in_specs,
            out_specs=out_spec,
        ),
        compiler_params=pltpu.CompilerParams(
            dimension_semantics=("parallel",),   # batch tiles shard across v7x TCs
            vmem_limit_bytes=32 * 1024 * 1024,
        ),
    )(x, w1, b1, w2, b2, w3, b3, w4, b4, w5, b5)

    # (1, B) -> (B, 1): pure reshape, no data movement.
    return out_t[0, :B].reshape(B, 1)


def init_params(key):
    """Deterministic init mimicking PyTorch nn.Linear defaults:
    uniform(-k, k), k = 1/sqrt(fan_in).  Weights in PyTorch (out_f, in_f) layout;
    biases stored as (out_f, 1) for lane-broadcast inside the kernel."""
    dims = [6, 128, 64, 32, 16, 1]
    params = {}
    for idx in range(5):
        fan_in, fan_out = dims[idx], dims[idx + 1]
        key, kw, kb = jax.random.split(key, 3)
        bound = 1.0 / jnp.sqrt(jnp.float32(fan_in))
        params[f"w{idx + 1}"] = jax.random.uniform(
            kw, (fan_out, fan_in), jnp.float32, -bound, bound)
        params[f"b{idx + 1}"] = jax.random.uniform(
            kb, (fan_out, 1), jnp.float32, -bound, bound)
    return params


def reference_forward(x, params):
    h = x
    for idx in range(1, 5):
        w, b = params[f"w{idx}"], params[f"b{idx}"]
        h = jnp.maximum(h @ w.T + b.reshape(1, -1), 0.0)
    return h @ params["w5"].T + params["b5"].reshape(1, -1)


if __name__ == "__main__":
    key = jax.random.PRNGKey(0)
    key, kx = jax.random.split(key)
    B = 1024
    x = jax.random.normal(kx, (B, 6), jnp.float32)
    params = init_params(key)
    ref = reference_forward(x, params)

    # Default (adaptive) tiling: single grid step for this small batch.
    out = jax.block_until_ready(deep_model_forward(x, params))
    assert out.shape == (B, 1)
    assert jnp.allclose(out, ref, atol=1e-3, rtol=1e-3), "mismatch vs reference"

    # Multi-step grid path (exercises pipelining / megacore sharding).
    out_multi = jax.block_until_ready(deep_model_forward(x, params, tile_b=256))
    assert jnp.allclose(out_multi, ref, atol=1e-3, rtol=1e-3), "mismatch (multi-step)"

    # Padded, non-multiple batch path.
    x_small = x[:200]
    out_small = jax.block_until_ready(deep_model_forward(x_small, params))
    assert out_small.shape == (200, 1)
    assert jnp.allclose(out_small, ref[:200], atol=1e-3, rtol=1e-3), "mismatch (padded path)"

    print("KERNEL_OK")
</pallas_src>

<mosaic_0001>
module attributes {stable_mosaic.version = 11 : i64} {
  func.func @mlp_kernel(%arg0: i32, %arg1: memref<1024x6xf32, #tpu.memory_space<vmem>>, %arg2: memref<128x6xf32, #tpu.memory_space<vmem>>, %arg3: memref<128x1xf32, #tpu.memory_space<vmem>>, %arg4: memref<64x128xf32, #tpu.memory_space<vmem>>, %arg5: memref<64x1xf32, #tpu.memory_space<vmem>>, %arg6: memref<32x64xf32, #tpu.memory_space<vmem>>, %arg7: memref<32x1xf32, #tpu.memory_space<vmem>>, %arg8: memref<16x32xf32, #tpu.memory_space<vmem>>, %arg9: memref<16x1xf32, #tpu.memory_space<vmem>>, %arg10: memref<1x16xf32, #tpu.memory_space<vmem>>, %arg11: memref<1x1xf32, #tpu.memory_space<vmem>>, %arg12: memref<1x1024xf32, #tpu.memory_space<vmem>>) attributes {dimension_semantics = [#tpu.dimension_semantics<parallel>], iteration_bounds = array<i64: 1>, scalar_prefetch = 0 : i64, scratch_operands = 0 : i64, tpu.core_type = #tpu.core_type<tc>, window_params = [{transform_indices = @transform_0, window_bounds = array<i64: 1024, 6>}, {pipeline_mode = #tpu.pipeline_mode<synchronous>, transform_indices = @transform_1, window_bounds = array<i64: 128, 6>}, {pipeline_mode = #tpu.pipeline_mode<synchronous>, transform_indices = @transform_2, window_bounds = array<i64: 128, 1>}, {pipeline_mode = #tpu.pipeline_mode<synchronous>, transform_indices = @transform_3, window_bounds = array<i64: 64, 128>}, {pipeline_mode = #tpu.pipeline_mode<synchronous>, transform_indices = @transform_4, window_bounds = array<i64: 64, 1>}, {pipeline_mode = #tpu.pipeline_mode<synchronous>, transform_indices = @transform_5, window_bounds = array<i64: 32, 64>}, {pipeline_mode = #tpu.pipeline_mode<synchronous>, transform_indices = @transform_6, window_bounds = array<i64: 32, 1>}, {pipeline_mode = #tpu.pipeline_mode<synchronous>, transform_indices = @transform_7, window_bounds = array<i64: 16, 32>}, {pipeline_mode = #tpu.pipeline_mode<synchronous>, transform_indices = @transform_8, window_bounds = array<i64: 16, 1>}, {pipeline_mode = #tpu.pipeline_mode<synchronous>, transform_indices = @transform_9, window_bounds = array<i64: 1, 16>}, {pipeline_mode = #tpu.pipeline_mode<synchronous>, transform_indices = @transform_10, window_bounds = array<i64: 1, 1>}, {transform_indices = @transform_11, window_bounds = array<i64: 1, 1024>}]} {
    %c0 = arith.constant 0 : index
    %c0_0 = arith.constant 0 : index
    %0 = vector.load %arg2[%c0, %c0_0] : memref<128x6xf32, #tpu.memory_space<vmem>>, vector<128x6xf32>
    %c0_1 = arith.constant 0 : index
    %c0_2 = arith.constant 0 : index
    %1 = vector.load %arg1[%c0_1, %c0_2] : memref<1024x6xf32, #tpu.memory_space<vmem>>, vector<1024x6xf32>
    %cst = arith.constant dense<0.000000e+00> : vector<128x1024xf32>
    %2 = tpu.matmul %0, %1, %cst {dimension_numbers = #tpu.dot_dimension_numbers<[1], [1], [0], [0], [0, 0, 1, 0], [], []>} : vector<128x6xf32>, vector<1024x6xf32>, vector<128x1024xf32> -> vector<128x1024xf32>
    %c0_3 = arith.constant 0 : index
    %c0_4 = arith.constant 0 : index
    %3 = vector.load %arg3[%c0_3, %c0_4] : memref<128x1xf32, #tpu.memory_space<vmem>>, vector<128x1xf32>
    %4 = vector.broadcast %3 : vector<128x1xf32> to vector<128x1024xf32>
    %5 = arith.addf %2, %4 : vector<128x1024xf32>
    %cst_5 = arith.constant 0.000000e+00 : f32
    %6 = vector.broadcast %cst_5 : f32 to vector<128x1024xf32>
    %7 = arith.maximumf %5, %6 : vector<128x1024xf32>
    %c0_6 = arith.constant 0 : index
    %c0_7 = arith.constant 0 : index
    %8 = vector.load %arg4[%c0_6, %c0_7] : memref<64x128xf32, #tpu.memory_space<vmem>>, vector<64x128xf32>
    %cst_8 = arith.constant dense<0.000000e+00> : vector<64x1024xf32>
    %9 = tpu.matmul %8, %7, %cst_8 {dimension_numbers = #tpu.dot_dimension_numbers<[1], [0], [0], [1], [0, 0, 1, 1], [], []>} : vector<64x128xf32>, vector<128x1024xf32>, vector<64x1024xf32> -> vector<64x1024xf32>
    %c0_9 = arith.constant 0 : index
    %c0_10 = arith.constant 0 : index
    %10 = vector.load %arg5[%c0_9, %c0_10] : memref<64x1xf32, #tpu.memory_space<vmem>>, vector<64x1xf32>
    %11 = vector.broadcast %10 : vector<64x1xf32> to vector<64x1024xf32>
    %12 = arith.addf %9, %11 : vector<64x1024xf32>
    %cst_11 = arith.constant 0.000000e+00 : f32
    %13 = vector.broadcast %cst_11 : f32 to vector<64x1024xf32>
    %14 = arith.maximumf %12, %13 : vector<64x1024xf32>
    %c0_12 = arith.constant 0 : index
    %c0_13 = arith.constant 0 : index
    %15 = vector.load %arg6[%c0_12, %c0_13] : memref<32x64xf32, #tpu.memory_space<vmem>>, vector<32x64xf32>
    %cst_14 = arith.constant dense<0.000000e+00> : vector<32x1024xf32>
    %16 = tpu.matmul %15, %14, %cst_14 {dimension_numbers = #tpu.dot_dimension_numbers<[1], [0], [0], [1], [0, 0, 1, 1], [], []>} : vector<32x64xf32>, vector<64x1024xf32>, vector<32x1024xf32> -> vector<32x1024xf32>
    %c0_15 = arith.constant 0 : index
    %c0_16 = arith.constant 0 : index
    %17 = vector.load %arg7[%c0_15, %c0_16] : memref<32x1xf32, #tpu.memory_space<vmem>>, vector<32x1xf32>
    %18 = vector.broadcast %17 : vector<32x1xf32> to vector<32x1024xf32>
    %19 = arith.addf %16, %18 : vector<32x1024xf32>
    %cst_17 = arith.constant 0.000000e+00 : f32
    %20 = vector.broadcast %cst_17 : f32 to vector<32x1024xf32>
    %21 = arith.maximumf %19, %20 : vector<32x1024xf32>
    %c0_18 = arith.constant 0 : index
    %c0_19 = arith.constant 0 : index
    %22 = vector.load %arg8[%c0_18, %c0_19] : memref<16x32xf32, #tpu.memory_space<vmem>>, vector<16x32xf32>
    %cst_20 = arith.constant dense<0.000000e+00> : vector<16x1024xf32>
    %23 = tpu.matmul %22, %21, %cst_20 {dimension_numbers = #tpu.dot_dimension_numbers<[1], [0], [0], [1], [0, 0, 1, 1], [], []>} : vector<16x32xf32>, vector<32x1024xf32>, vector<16x1024xf32> -> vector<16x1024xf32>
    %c0_21 = arith.constant 0 : index
    %c0_22 = arith.constant 0 : index
    %24 = vector.load %arg9[%c0_21, %c0_22] : memref<16x1xf32, #tpu.memory_space<vmem>>, vector<16x1xf32>
    %25 = vector.broadcast %24 : vector<16x1xf32> to vector<16x1024xf32>
    %26 = arith.addf %23, %25 : vector<16x1024xf32>
    %cst_23 = arith.constant 0.000000e+00 : f32
    %27 = vector.broadcast %cst_23 : f32 to vector<16x1024xf32>
    %28 = arith.maximumf %26, %27 : vector<16x1024xf32>
    %c0_24 = arith.constant 0 : index
    %c0_25 = arith.constant 0 : index
    %29 = vector.load %arg10[%c0_24, %c0_25] : memref<1x16xf32, #tpu.memory_space<vmem>>, vector<1x16xf32>
    %cst_26 = arith.constant dense<0.000000e+00> : vector<1x1024xf32>
    %30 = tpu.matmul %29, %28, %cst_26 {dimension_numbers = #tpu.dot_dimension_numbers<[1], [0], [0], [1], [0, 0, 1, 1], [], []>} : vector<1x16xf32>, vector<16x1024xf32>, vector<1x1024xf32> -> vector<1x1024xf32>
    %c0_27 = arith.constant 0 : index
    %c0_28 = arith.constant 0 : index
    %31 = vector.load %arg11[%c0_27, %c0_28] : memref<1x1xf32, #tpu.memory_space<vmem>>, vector<1x1xf32>
    %32 = vector.broadcast %31 : vector<1x1xf32> to vector<1x1024xf32>
    %33 = arith.addf %30, %32 : vector<1x1024xf32>
    %c0_29 = arith.constant 0 : index
    %c0_30 = arith.constant 0 : index
    %34 = vector.load %arg12[%c0_29, %c0_30] : memref<1x1024xf32, #tpu.memory_space<vmem>>, vector<1x1024xf32>
    tpu.vector_store %arg12[%c0_29, %c0_30], %33 {strides = array<i32>} : memref<1x1024xf32, #tpu.memory_space<vmem>>, vector<1x1024xf32>,
    return
  }
  func.func @transform_0(%arg0: i32) -> (i32, i32) {
    %c0_i32 = arith.constant 0 : i32
    %c0_i32_0 = arith.constant 0 : i32
    return %arg0, %c0_i32 : i32, i32
  }
  func.func @transform_1(%arg0: i32) -> (i32, i32) {
    %c0_i32 = arith.constant 0 : i32
    %c0_i32_0 = arith.constant 0 : i32
    %c0_i32_1 = arith.constant 0 : i32
    return %c0_i32, %c0_i32_0 : i32, i32
  }
  func.func @transform_2(%arg0: i32) -> (i32, i32) {
    %c0_i32 = arith.constant 0 : i32
    %c0_i32_0 = arith.constant 0 : i32
    %c0_i32_1 = arith.constant 0 : i32
    return %c0_i32, %c0_i32_0 : i32, i32
  }
  func.func @transform_3(%arg0: i32) -> (i32, i32) {
    %c0_i32 = arith.constant 0 : i32
    %c0_i32_0 = arith.constant 0 : i32
    %c0_i32_1 = arith.constant 0 : i32
    return %c0_i32, %c0_i32_0 : i32, i32
  }
  func.func @transform_4(%arg0: i32) -> (i32, i32) {
    %c0_i32 = arith.constant 0 : i32
    %c0_i32_0 = arith.constant 0 : i32
    %c0_i32_1 = arith.constant 0 : i32
    return %c0_i32, %c0_i32_0 : i32, i32
  }
  func.func @transform_5(%arg0: i32) -> (i32, i32) {
    %c0_i32 = arith.constant 0 : i32
    %c0_i32_0 = arith.constant 0 : i32
    %c0_i32_1 = arith.constant 0 : i32
    return %c0_i32, %c0_i32_0 : i32, i32
  }
  func.func @transform_6(%arg0: i32) -> (i32, i32) {
    %c0_i32 = arith.constant 0 : i32
    %c0_i32_0 = arith.constant 0 : i32
    %c0_i32_1 = arith.constant 0 : i32
    return %c0_i32, %c0_i32_0 : i32, i32
  }
  func.func @transform_7(%arg0: i32) -> (i32, i32) {
    %c0_i32 = arith.constant 0 : i32
    %c0_i32_0 = arith.constant 0 : i32
    %c0_i32_1 = arith.constant 0 : i32
    return %c0_i32, %c0_i32_0 : i32, i32
  }
  func.func @transform_8(%arg0: i32) -> (i32, i32) {
    %c0_i32 = arith.constant 0 : i32
    %c0_i32_0 = arith.constant 0 : i32
    %c0_i32_1 = arith.constant 0 : i32
    return %c0_i32, %c0_i32_0 : i32, i32
  }
  func.func @transform_9(%arg0: i32) -> (i32, i32) {
    %c0_i32 = arith.constant 0 : i32
    %c0_i32_0 = arith.constant 0 : i32
    %c0_i32_1 = arith.constant 0 : i32
    return %c0_i32, %c0_i32_0 : i32, i32
  }
  func.func @transform_10(%arg0: i32) -> (i32, i32) {
    %c0_i32 = arith.constant 0 : i32
    %c0_i32_0 = arith.constant 0 : i32
    %c0_i32_1 = arith.constant 0 : i32
    return %c0_i32, %c0_i32_0 : i32, i32
  }
  func.func @transform_11(%arg0: i32) -> (i32, i32) {
    %c0_i32 = arith.constant 0 : i32
    %c0_i32_0 = arith.constant 0 : i32
    return %c0_i32, %arg0 : i32, i32
  }
}

</mosaic_0001>

<llo_original>
// kernel: tpu_custom_call.1
$region0: #{tpu_custom_call.1}
  #allocation0 [shape = 'u32[]', space=smem, size = 0x4, offset = 0x4, fixed_abs, tag = 'smem constant byte address 0x4 - core index']
  #allocation1 [shape = 'u32[144,128]{1,0:T(1,128)}', space=vmem, size = 0x12000, scoped, tag = 'internal scratch']
  #allocation2 [shape = 'f32[1,1]{1,0:T(1,128)S(1)}', space=vmem, size = 0x200, scoped, tag = 'scoped memory for tpu_custom_call.1']
  %s0 = inlined_call_operand.vmem [shape: f32[1024,6], index: 0, kind: input, shape index: {}]
  %s1 = inlined_call_operand.vmem [shape: f32[128,6], index: 1, kind: input, shape index: {}]
  %s2 = inlined_call_operand.vmem [shape: f32[128,1], index: 2, kind: input, shape index: {}]
  %s3 = inlined_call_operand.vmem [shape: f32[64,128], index: 3, kind: input, shape index: {}]
  %s4 = inlined_call_operand.vmem [shape: f32[64,1], index: 4, kind: input, shape index: {}]
  %s5 = inlined_call_operand.vmem [shape: f32[32,64], index: 5, kind: input, shape index: {}]
  %s6 = inlined_call_operand.vmem [shape: f32[32,1], index: 6, kind: input, shape index: {}]
  %s7 = inlined_call_operand.vmem [shape: f32[16,32], index: 7, kind: input, shape index: {}]
  %s8 = inlined_call_operand.vmem [shape: f32[16,1], index: 8, kind: input, shape index: {}]
  %s9 = inlined_call_operand.vmem [shape: f32[1,16], index: 9, kind: input, shape index: {}]
  %s10 = inlined_call_operand.<no memory space> [shape: f32[1,1], index: 10, kind: input, shape index: {}]
  %s11 = inlined_call_operand.hbm [shape: f32[1,1024], index: 11, kind: output, shape index: {}]
  %s12 = sld [smem:[#allocation0]]
  $region54: #{tpu_custom_call.1} parent=0
    _
  %s14 = ssub.s32 1, %s12
  %s15 = scalar_select 0, %s14, %s12
  %v16 = vstv %s10
  %17 = vst [vmem:[#allocation2] sm:$0x1] %v16
  $region1: #{tpu_custom_call.1} parent=0
    #allocation3 [shape = 'u8[4096]{0}', space=vmem, size = 0x1000, scoped, tag = 'output window, operand 0, single buffered']
    #allocation4 [shape = 's32[1]{0}', space=sflag, size = 0x4, scoped, tag = 'scoped memory for tpu_custom_call.1']
    %18 = vsyncpa [#allocation4], 0
    // Predicated region
    $region2: #{tpu_custom_call.1} parent=1 // pred_check
      _
    $region3: #{tpu_custom_call.1} parent=1 // pred_check_branch
      %20 = sbr.rel (0) target = $region5
    $region4: #{tpu_custom_call.1} parent=1 // pred_region
      _
    $region5: #{tpu_custom_call.1} parent=1 // pred_fallthru
      _
    // Predicated region
    $region6: #{tpu_custom_call.1} parent=1 // pred_check
      _
    $region7: #{tpu_custom_call.1} parent=1 // pred_check_branch
      %22 = sbr.rel (0) target = $region9
    $region8: #{tpu_custom_call.1} parent=1 // pred_region
      _
    $region9: #{tpu_custom_call.1} parent=1 // pred_fallthru
      _
    // Predicated region
    $region10: #{tpu_custom_call.1} parent=1 // pred_check
      _
    $region11: #{tpu_custom_call.1} parent=1 // pred_check_branch
      %24 = sbr.rel (0) target = $region13
    $region12: #{tpu_custom_call.1} parent=1 // pred_region
      _
    $region13: #{tpu_custom_call.1} parent=1 // pred_fallthru
      _
    // Predicated region
    $region14: #{tpu_custom_call.1} parent=1 // pred_check
      _
    $region15: #{tpu_custom_call.1} parent=1 // pred_check_branch
      %26 = sbr.rel (0) target = $region17
    $region16: #{tpu_custom_call.1} parent=1 // pred_region
      _
    $region17: #{tpu_custom_call.1} parent=1 // pred_fallthru
      _
    // Predicated region
    $region18: #{tpu_custom_call.1} parent=1 // pred_check
      _
    $region19: #{tpu_custom_call.1} parent=1 // pred_check_branch
      %28 = sbr.rel (0) target = $region21
    $region20: #{tpu_custom_call.1} parent=1 // pred_region
      _
    $region21: #{tpu_custom_call.1} parent=1 // pred_fallthru
      _
    // Predicated region
    $region22: #{tpu_custom_call.1} parent=1 // pred_check
      _
    $region23: #{tpu_custom_call.1} parent=1 // pred_check_branch
      %30 = sbr.rel (0) target = $region25
    $region24: #{tpu_custom_call.1} parent=1 // pred_region
      _
    $region25: #{tpu_custom_call.1} parent=1 // pred_fallthru
      _
    // Predicated region
    $region26: #{tpu_custom_call.1} parent=1 // pred_check
      _
    $region27: #{tpu_custom_call.1} parent=1 // pred_check_branch
      %32 = sbr.rel (0) target = $region29
    $region28: #{tpu_custom_call.1} parent=1 // pred_region
      _
    $region29: #{tpu_custom_call.1} parent=1 // pred_fallthru
      _
    // Predicated region
    $region30: #{tpu_custom_call.1} parent=1 // pred_check
      _
    $region31: #{tpu_custom_call.1} parent=1 // pred_check_branch
      %34 = sbr.rel (0) target = $region33
    $region32: #{tpu_custom_call.1} parent=1 // pred_region
      _
    $region33: #{tpu_custom_call.1} parent=1 // pred_fallthru
      _
    // Predicated region
    $region34: #{tpu_custom_call.1} parent=1 // pred_check
      _
    $region35: #{tpu_custom_call.1} parent=1 // pred_check_branch
      %36 = sbr.rel (0) target = $region37
    $region36: #{tpu_custom_call.1} parent=1 // pred_region
      _
    $region37: #{tpu_custom_call.1} parent=1 // pred_fallthru
      _
    // Predicated region
    $region38: #{tpu_custom_call.1} parent=1 // pred_check
      _
    $region39: #{tpu_custom_call.1} parent=1 // pred_check_branch
      %38 = sbr.rel (0) target = $region41
    $region40: #{tpu_custom_call.1} parent=1 // pred_region
      _
    $region41: #{tpu_custom_call.1} parent=1 // pred_fallthru
      _
    // Predicated region
    $region42: #{tpu_custom_call.1} parent=1 // pred_check
      _
    $region43: #{tpu_custom_call.1} parent=1 // pred_check_branch
      %40 = sbr.rel (0) target = $region45
    $region44: #{tpu_custom_call.1} parent=1 // pred_region
      _
    $region45: #{tpu_custom_call.1} parent=1 // pred_fallthru
      _
    %v41 = vld [vmem:[%s1] sm:$0xff]
    %v42 = vld [vmem:[%s1 + $0x8] sm:$0xff]
    %v43 = vld [vmem:[%s1 + $0x10] sm:$0xff]
    %v44 = vld [vmem:[%s1 + $0x18] sm:$0xff]
    %v45 = vld [vmem:[%s1 + $0x20] sm:$0xff]
    %v46 = vld [vmem:[%s1 + $0x28] sm:$0xff]
    %v47 = vld [vmem:[%s1 + $0x30] sm:$0xff]
    %v48 = vld [vmem:[%s1 + $0x38] sm:$0xff]
    %v49 = vld [vmem:[%s1 + $0x40] sm:$0xff]
    %v50 = vld [vmem:[%s1 + $0x48] sm:$0xff]
    %v51 = vld [vmem:[%s1 + $0x50] sm:$0xff]
    %v52 = vld [vmem:[%s1 + $0x58] sm:$0xff]
    %v53 = vld [vmem:[%s1 + $0x60] sm:$0xff]
    %v54 = vld [vmem:[%s1 + $0x68] sm:$0xff]
    %v55 = vld [vmem:[%s1 + $0x70] sm:$0xff]
    %v56 = vld [vmem:[%s1 + $0x78] sm:$0xff]
    %v57 = vld [vmem:[%s0] sm:$0xff]
    %v58 = vld [vmem:[%s0 + $0x8] sm:$0xff]
    %v59 = vld [vmem:[%s0 + $0x10] sm:$0xff]
    %v60 = vld [vmem:[%s0 + $0x18] sm:$0xff]
    %v61 = vld [vmem:[%s0 + $0x20] sm:$0xff]
    %v62 = vld [vmem:[%s0 + $0x28] sm:$0xff]
    %v63 = vld [vmem:[%s0 + $0x30] sm:$0xff]
    %v64 = vld [vmem:[%s0 + $0x38] sm:$0xff]
    %v65 = vld [vmem:[%s0 + $0x40] sm:$0xff]
    %v66 = vld [vmem:[%s0 + $0x48] sm:$0xff]
    %v67 = vld [vmem:[%s0 + $0x50] sm:$0xff]
    %v68 = vld [vmem:[%s0 + $0x58] sm:$0xff]
    %v69 = vld [vmem:[%s0 + $0x60] sm:$0xff]
    %v70 = vld [vmem:[%s0 + $0x68] sm:$0xff]
    %v71 = vld [vmem:[%s0 + $0x70] sm:$0xff]
    %v72 = vld [vmem:[%s0 + $0x78] sm:$0xff]
    %v73 = vld [vmem:[%s0 + $0x80] sm:$0xff]
    %v74 = vld [vmem:[%s0 + $0x88] sm:$0xff]
    %v75 = vld [vmem:[%s0 + $0x90] sm:$0xff]
    %v76 = vld [vmem:[%s0 + $0x98] sm:$0xff]
    %v77 = vld [vmem:[%s0 + $0xa0] sm:$0xff]
    %v78 = vld [vmem:[%s0 + $0xa8] sm:$0xff]
    %v79 = vld [vmem:[%s0 + $0xb0] sm:$0xff]
    %v80 = vld [vmem:[%s0 + $0xb8] sm:$0xff]
    %v81 = vld [vmem:[%s0 + $0xc0] sm:$0xff]
    %v82 = vld [vmem:[%s0 + $0xc8] sm:$0xff]
    %v83 = vld [vmem:[%s0 + $0xd0] sm:$0xff]
    %v84 = vld [vmem:[%s0 + $0xd8] sm:$0xff]
    %v85 = vld [vmem:[%s0 + $0xe0] sm:$0xff]
    %v86 = vld [vmem:[%s0 + $0xe8] sm:$0xff]
    %v87 = vld [vmem:[%s0 + $0xf0] sm:$0xff]
    %v88 = vld [vmem:[%s0 + $0xf8] sm:$0xff]
    %v89 = vld [vmem:[%s0 + $0x100] sm:$0xff]
    %v90 = vld [vmem:[%s0 + $0x108] sm:$0xff]
    %v91 = vld [vmem:[%s0 + $0x110] sm:$0xff]
    %v92 = vld [vmem:[%s0 + $0x118] sm:$0xff]
    %v93 = vld [vmem:[%s0 + $0x120] sm:$0xff]
    %v94 = vld [vmem:[%s0 + $0x128] sm:$0xff]
    %v95 = vld [vmem:[%s0 + $0x130] sm:$0xff]
    %v96 = vld [vmem:[%s0 + $0x138] sm:$0xff]
    %v97 = vld [vmem:[%s0 + $0x140] sm:$0xff]
    %v98 = vld [vmem:[%s0 + $0x148] sm:$0xff]
    %v99 = vld [vmem:[%s0 + $0x150] sm:$0xff]
    %v100 = vld [vmem:[%s0 + $0x158] sm:$0xff]
    %v101 = vld [vmem:[%s0 + $0x160] sm:$0xff]
    %v102 = vld [vmem:[%s0 + $0x168] sm:$0xff]
    %v103 = vld [vmem:[%s0 + $0x170] sm:$0xff]
    %v104 = vld [vmem:[%s0 + $0x178] sm:$0xff]
    %v105 = vld [vmem:[%s0 + $0x180] sm:$0xff]
    %v106 = vld [vmem:[%s0 + $0x188] sm:$0xff]
    %v107 = vld [vmem:[%s0 + $0x190] sm:$0xff]
    %v108 = vld [vmem:[%s0 + $0x198] sm:$0xff]
    %v109 = vld [vmem:[%s0 + $0x1a0] sm:$0xff]
    %v110 = vld [vmem:[%s0 + $0x1a8] sm:$0xff]
    %v111 = vld [vmem:[%s0 + $0x1b0] sm:$0xff]
    %v112 = vld [vmem:[%s0 + $0x1b8] sm:$0xff]
    %v113 = vld [vmem:[%s0 + $0x1c0] sm:$0xff]
    %v114 = vld [vmem:[%s0 + $0x1c8] sm:$0xff]
    %v115 = vld [vmem:[%s0 + $0x1d0] sm:$0xff]
    %v116 = vld [vmem:[%s0 + $0x1d8] sm:$0xff]
    %v117 = vld [vmem:[%s0 + $0x1e0] sm:$0xff]
    %v118 = vld [vmem:[%s0 + $0x1e8] sm:$0xff]
    %v119 = vld [vmem:[%s0 + $0x1f0] sm:$0xff]
    %v120 = vld [vmem:[%s0 + $0x1f8] sm:$0xff]
    %v121 = vld [vmem:[%s0 + $0x200] sm:$0xff]
    %v122 = vld [vmem:[%s0 + $0x208] sm:$0xff]
    %v123 = vld [vmem:[%s0 + $0x210] sm:$0xff]
    %v124 = vld [vmem:[%s0 + $0x218] sm:$0xff]
    %v125 = vld [vmem:[%s0 + $0x220] sm:$0xff]
    %v126 = vld [vmem:[%s0 + $0x228] sm:$0xff]
    %v127 = vld [vmem:[%s0 + $0x230] sm:$0xff]
    %v128 = vld [vmem:[%s0 + $0x238] sm:$0xff]
    %v129 = vld [vmem:[%s0 + $0x240] sm:$0xff]
    %v130 = vld [vmem:[%s0 + $0x248] sm:$0xff]
    %v131 = vld [vmem:[%s0 + $0x250] sm:$0xff]
    %v132 = vld [vmem:[%s0 + $0x258] sm:$0xff]
    %v133 = vld [vmem:[%s0 + $0x260] sm:$0xff]
    %v134 = vld [vmem:[%s0 + $0x268] sm:$0xff]
    %v135 = vld [vmem:[%s0 + $0x270] sm:$0xff]
    %v136 = vld [vmem:[%s0 + $0x278] sm:$0xff]
    %v137 = vld [vmem:[%s0 + $0x280] sm:$0xff]
    %v138 = vld [vmem:[%s0 + $0x288] sm:$0xff]
    %v139 = vld [vmem:[%s0 + $0x290] sm:$0xff]
    %v140 = vld [vmem:[%s0 + $0x298] sm:$0xff]
    %v141 = vld [vmem:[%s0 + $0x2a0] sm:$0xff]
    %v142 = vld [vmem:[%s0 + $0x2a8] sm:$0xff]
    %v143 = vld [vmem:[%s0 + $0x2b0] sm:$0xff]
    %v144 = vld [vmem:[%s0 + $0x2b8] sm:$0xff]
    %v145 = vld [vmem:[%s0 + $0x2c0] sm:$0xff]
    %v146 = vld [vmem:[%s0 + $0x2c8] sm:$0xff]
    %v147 = vld [vmem:[%s0 + $0x2d0] sm:$0xff]
    %v148 = vld [vmem:[%s0 + $0x2d8] sm:$0xff]
    %v149 = vld [vmem:[%s0 + $0x2e0] sm:$0xff]
    %v150 = vld [vmem:[%s0 + $0x2e8] sm:$0xff]
    %v151 = vld [vmem:[%s0 + $0x2f0] sm:$0xff]
    %v152 = vld [vmem:[%s0 + $0x2f8] sm:$0xff]
    %v153 = vld [vmem:[%s0 + $0x300] sm:$0xff]
    %v154 = vld [vmem:[%s0 + $0x308] sm:$0xff]
    %v155 = vld [vmem:[%s0 + $0x310] sm:$0xff]
    %v156 = vld [vmem:[%s0 + $0x318] sm:$0xff]
    %v157 = vld [vmem:[%s0 + $0x320] sm:$0xff]
    %v158 = vld [vmem:[%s0 + $0x328] sm:$0xff]
    %v159 = vld [vmem:[%s0 + $0x330] sm:$0xff]
    %v160 = vld [vmem:[%s0 + $0x338] sm:$0xff]
    %v161 = vld [vmem:[%s0 + $0x340] sm:$0xff]
    %v162 = vld [vmem:[%s0 + $0x348] sm:$0xff]
    %v163 = vld [vmem:[%s0 + $0x350] sm:$0xff]
    %v164 = vld [vmem:[%s0 + $0x358] sm:$0xff]
    %v165 = vld [vmem:[%s0 + $0x360] sm:$0xff]
    %v166 = vld [vmem:[%s0 + $0x368] sm:$0xff]
    %v167 = vld [vmem:[%s0 + $0x370] sm:$0xff]
    %v168 = vld [vmem:[%s0 + $0x378] sm:$0xff]
    %v169 = vld [vmem:[%s0 + $0x380] sm:$0xff]
    %v170 = vld [vmem:[%s0 + $0x388] sm:$0xff]
    %v171 = vld [vmem:[%s0 + $0x390] sm:$0xff]
    %v172 = vld [vmem:[%s0 + $0x398] sm:$0xff]
    %v173 = vld [vmem:[%s0 + $0x3a0] sm:$0xff]
    %v174 = vld [vmem:[%s0 + $0x3a8] sm:$0xff]
    %v175 = vld [vmem:[%s0 + $0x3b0] sm:$0xff]
    %v176 = vld [vmem:[%s0 + $0x3b8] sm:$0xff]
    %v177 = vld [vmem:[%s0 + $0x3c0] sm:$0xff]
    %v178 = vld [vmem:[%s0 + $0x3c8] sm:$0xff]
    %v179 = vld [vmem:[%s0 + $0x3d0] sm:$0xff]
    %v180 = vld [vmem:[%s0 + $0x3d8] sm:$0xff]
    %v181 = vld [vmem:[%s0 + $0x3e0] sm:$0xff]
    %v182 = vld [vmem:[%s0 + $0x3e8] sm:$0xff]
    %v183 = vld [vmem:[%s0 + $0x3f0] sm:$0xff]
    %v184 = vld [vmem:[%s0 + $0x3f8] sm:$0xff]
    %v185 = vld [vmem:[%s2] sm:$0xff]
    %v186 = vld [vmem:[%s2 + $0x8] sm:$0xff]
    %v187 = vld [vmem:[%s2 + $0x10] sm:$0xff]
    %v188 = vld [vmem:[%s2 + $0x18] sm:$0xff]
    %v189 = vld [vmem:[%s2 + $0x20] sm:$0xff]
    %v190 = vld [vmem:[%s2 + $0x28] sm:$0xff]
    %v191 = vld [vmem:[%s2 + $0x30] sm:$0xff]
    %v192 = vld [vmem:[%s2 + $0x38] sm:$0xff]
    %v193 = vld [vmem:[%s2 + $0x40] sm:$0xff]
    %v194 = vld [vmem:[%s2 + $0x48] sm:$0xff]
    %v195 = vld [vmem:[%s2 + $0x50] sm:$0xff]
    %v196 = vld [vmem:[%s2 + $0x58] sm:$0xff]
    %v197 = vld [vmem:[%s2 + $0x60] sm:$0xff]
    %v198 = vld [vmem:[%s2 + $0x68] sm:$0xff]
    %v199 = vld [vmem:[%s2 + $0x70] sm:$0xff]
    %v200 = vld [vmem:[%s2 + $0x78] sm:$0xff]
    %202 = vset.pattern.permute.xlu0 0
    %203 = vperm.xlu0 %202, %v185
    %v204 = vpop.permute.xlu0 %203
    %207 = vset.pattern.permute.xlu0 0
    %208 = vperm.xlu0 %207, %v186
    %v209 = vpop.permute.xlu0 %208
    %212 = vset.pattern.permute.xlu0 0
    %213 = vperm.xlu0 %212, %v187
    %v214 = vpop.permute.xlu0 %213
    %217 = vset.pattern.permute.xlu0 0
    %218 = vperm.xlu0 %217, %v188
    %v219 = vpop.permute.xlu0 %218
    %222 = vset.pattern.permute.xlu0 0
    %223 = vperm.xlu0 %222, %v189
    %v224 = vpop.permute.xlu0 %223
    %227 = vset.pattern.permute.xlu0 0
    %228 = vperm.xlu0 %227, %v190
    %v229 = vpop.permute.xlu0 %228
    %232 = vset.pattern.permute.xlu0 0
    %233 = vperm.xlu0 %232, %v191
    %v234 = vpop.permute.xlu0 %233
    %237 = vset.pattern.permute.xlu0 0
    %238 = vperm.xlu0 %237, %v192
    %v239 = vpop.permute.xlu0 %238
    %242 = vset.pattern.permute.xlu0 0
    %243 = vperm.xlu0 %242, %v193
    %v244 = vpop.permute.xlu0 %243
    %247 = vset.pattern.permute.xlu0 0
    %248 = vperm.xlu0 %247, %v194
    %v249 = vpop.permute.xlu0 %248
    %252 = vset.pattern.permute.xlu0 0
    %253 = vperm.xlu0 %252, %v195
    %v254 = vpop.permute.xlu0 %253
    %257 = vset.pattern.permute.xlu0 0
    %258 = vperm.xlu0 %257, %v196
    %v259 = vpop.permute.xlu0 %258
    %262 = vset.pattern.permute.xlu0 0
    %263 = vperm.xlu0 %262, %v197
    %v264 = vpop.permute.xlu0 %263
    %267 = vset.pattern.permute.xlu0 0
    %268 = vperm.xlu0 %267, %v198
    %v269 = vpop.permute.xlu0 %268
    %272 = vset.pattern.permute.xlu0 0
    %273 = vperm.xlu0 %272, %v199
    %v274 = vpop.permute.xlu0 %273
    %277 = vset.pattern.permute.xlu0 0
    %278 = vperm.xlu0 %277, %v200
    %v279 = vpop.permute.xlu0 %278
    %vm281 = vcmask 48128
    %v283 = vsel %vm281, %v41, 0
    %v286 = vsel %vm281, %v42, 0
    %v289 = vsel %vm281, %v43, 0
    %v292 = vsel %vm281, %v44, 0
    %v295 = vsel %vm281, %v45, 0
    %v298 = vsel %vm281, %v46, 0
    %v301 = vsel %vm281, %v47, 0
    %v304 = vsel %vm281, %v48, 0
    %v307 = vsel %vm281, %v49, 0
    %v310 = vsel %vm281, %v50, 0
    %v313 = vsel %vm281, %v51, 0
    %v316 = vsel %vm281, %v52, 0
    %v319 = vsel %vm281, %v53, 0
    %v322 = vsel %vm281, %v54, 0
    %v325 = vsel %vm281, %v55, 0
    %v328 = vsel %vm281, %v56, 0
    %v331 = vsel %vm281, %v57, 0
    %v334 = vsel %vm281, %v58, 0
    %v337 = vsel %vm281, %v59, 0
    %v340 = vsel %vm281, %v60, 0
    %v343 = vsel %vm281, %v61, 0
    %v346 = vsel %vm281, %v62, 0
    %v349 = vsel %vm281, %v63, 0
    %v352 = vsel %vm281, %v64, 0
    %v355 = vsel %vm281, %v65, 0
    %v358 = vsel %vm281, %v66, 0
    %v361 = vsel %vm281, %v67, 0
    %v364 = vsel %vm281, %v68, 0
    %v367 = vsel %vm281, %v69, 0
    %v370 = vsel %vm281, %v70, 0
    %v373 = vsel %vm281, %v71, 0
    %v376 = vsel %vm281, %v72, 0
    %v379 = vsel %vm281, %v73, 0
    %v382 = vsel %vm281, %v74, 0
    %v385 = vsel %vm281, %v75, 0
    %v388 = vsel %vm281, %v76, 0
    %v391 = vsel %vm281, %v77, 0
    %v394 = vsel %vm281, %v78, 0
    %v397 = vsel %vm281, %v79, 0
    %v400 = vsel %vm281, %v80, 0
    %v403 = vsel %vm281, %v81, 0
    %v406 = vsel %vm281, %v82, 0
    %v409 = vsel %vm281, %v83, 0
    %v412 = vsel %vm281, %v84, 0
    %v415 = vsel %vm281, %v85, 0
    %v418 = vsel %vm281, %v86, 0
    %v421 = vsel %vm281, %v87, 0
    %v424 = vsel %vm281, %v88, 0
    %v427 = vsel %vm281, %v89, 0
    %v430 = vsel %vm281, %v90, 0
    %v433 = vsel %vm281, %v91, 0
    %v436 = vsel %vm281, %v92, 0
    %v439 = vsel %vm281, %v93, 0
    %v442 = vsel %vm281, %v94, 0
    %v445 = vsel %vm281, %v95, 0
    %v448 = vsel %vm281, %v96, 0
    %v451 = vsel %vm281, %v97, 0
    %v454 = vsel %vm281, %v98, 0
    %v457 = vsel %vm281, %v99, 0
    %v460 = vsel %vm281, %v100, 0
    %v463 = vsel %vm281, %v101, 0
    %v466 = vsel %vm281, %v102, 0
    %v469 = vsel %vm281, %v103, 0
    %v472 = vsel %vm281, %v104, 0
    %v475 = vsel %vm281, %v105, 0
    %v478 = vsel %vm281, %v106, 0
    %v481 = vsel %vm281, %v107, 0
    %v484 = vsel %vm281, %v108, 0
    %v487 = vsel %vm281, %v109, 0
    %v490 = vsel %vm281, %v110, 0
    %v493 = vsel %vm281, %v111, 0
    %v496 = vsel %vm281, %v112, 0
    %v499 = vsel %vm281, %v113, 0
    %v502 = vsel %vm281, %v114, 0
    %v505 = vsel %vm281, %v115, 0
    %v508 = vsel %vm281, %v116, 0
    %v511 = vsel %vm281, %v117, 0
    %v514 = vsel %vm281, %v118, 0
    %v517 = vsel %vm281, %v119, 0
    %v520 = vsel %vm281, %v120, 0
    %v523 = vsel %vm281, %v121, 0
    %v526 = vsel %vm281, %v122, 0
    %v529 = vsel %vm281, %v123, 0
    %v532 = vsel %vm281, %v124, 0
    %v535 = vsel %vm281, %v125, 0
    %v538 = vsel %vm281, %v126, 0
    %v541 = vsel %vm281, %v127, 0
    %v544 = vsel %vm281, %v128, 0
    %v547 = vsel %vm281, %v129, 0
    %v550 = vsel %vm281, %v130, 0
    %v553 = vsel %vm281, %v131, 0
    %v556 = vsel %vm281, %v132, 0
    %v559 = vsel %vm281, %v133, 0
    %v562 = vsel %vm281, %v134, 0
    %v565 = vsel %vm281, %v135, 0
    %v568 = vsel %vm281, %v136, 0
    %v571 = vsel %vm281, %v137, 0
    %v574 = vsel %vm281, %v138, 0
    %v577 = vsel %vm281, %v139, 0
    %v580 = vsel %vm281, %v140, 0
    %v583 = vsel %vm281, %v141, 0
    %v586 = vsel %vm281, %v142, 0
    %v589 = vsel %vm281, %v143, 0
    %v592 = vsel %vm281, %v144, 0
    %v595 = vsel %vm281, %v145, 0
    %v598 = vsel %vm281, %v146, 0
    %v601 = vsel %vm281, %v147, 0
    %v604 = vsel %vm281, %v148, 0
    %v607 = vsel %vm281, %v149, 0
    %v610 = vsel %vm281, %v150, 0
    %v613 = vsel %vm281, %v151, 0
    %v616 = vsel %vm281, %v152, 0
    %v619 = vsel %vm281, %v153, 0
    %v622 = vsel %vm281, %v154, 0
    %v625 = vsel %vm281, %v155, 0
    %v628 = vsel %vm281, %v156, 0
    %v631 = vsel %vm281, %v157, 0
    %v634 = vsel %vm281, %v158, 0
    %v637 = vsel %vm281, %v159, 0
    %v640 = vsel %vm281, %v160, 0
    %v643 = vsel %vm281, %v161, 0
    %v646 = vsel %vm281, %v162, 0
    %v649 = vsel %vm281, %v163, 0
    %v652 = vsel %vm281, %v164, 0
    %v655 = vsel %vm281, %v165, 0
    %v658 = vsel %vm281, %v166, 0
    %v661 = vsel %vm281, %v167, 0
    %v664 = vsel %vm281, %v168, 0
    %v667 = vsel %vm281, %v169, 0
    %v670 = vsel %vm281, %v170, 0
    %v673 = vsel %vm281, %v171, 0
    %v676 = vsel %vm281, %v172, 0
    %v679 = vsel %vm281, %v173, 0
    %v682 = vsel %vm281, %v174, 0
    %v685 = vsel %vm281, %v175, 0
    %v688 = vsel %vm281, %v176, 0
    %v691 = vsel %vm281, %v177, 0
    %v694 = vsel %vm281, %v178, 0
    %v697 = vsel %vm281, %v179, 0
    %v700 = vsel %vm281, %v180, 0
    %v703 = vsel %vm281, %v181, 0
    %v706 = vsel %vm281, %v182, 0
    %v709 = vsel %vm281, %v183, 0
    %v712 = vsel %vm281, %v184, 0
    %714 = vmatprep.subr.mxu0 0.0
    %715 = vmatpush1.xpose.msra.mxu0 %v331
    %716 = vmatprep.subr.mxu0 0.0
    %717 = vmatpush1.xpose.msra.mxu0 %v334
    %718 = vmatprep.subr.mxu0 0.0
    %719 = vmatpush1.xpose.msra.mxu0 %v337
    %720 = vmatprep.subr.mxu0 0.0
    %721 = vmatpush1.xpose.msra.mxu0 %v340
    %722 = vmatprep.subr.mxu0 0.0
    %723 = vmatpush1.xpose.msra.mxu0 %v343
    %724 = vmatprep.subr.mxu0 0.0
    %725 = vmatpush1.xpose.msra.mxu0 %v346
    %726 = vmatprep.subr.mxu0 0.0
    %727 = vmatpush1.xpose.msra.mxu0 %v349
    %728 = vmatprep.subr.mxu0 0.0
    %729 = vmatpush1.xpose.msra.mxu0 %v352
    %730 = vmatprep.subr.mxu0 0.0
    %731 = vmatpush1.xpose.msra.mxu0 %v355
    %732 = vmatprep.subr.mxu0 0.0
    %733 = vmatpush1.xpose.msra.mxu0 %v358
    %734 = vmatprep.subr.mxu0 0.0
    %735 = vmatpush1.xpose.msra.mxu0 %v361
    %736 = vmatprep.subr.mxu0 0.0
    %737 = vmatpush1.xpose.msra.mxu0 %v364
    %738 = vmatprep.subr.mxu0 0.0
    %739 = vmatpush1.xpose.msra.mxu0 %v367
    %740 = vmatprep.subr.mxu0 0.0
    %741 = vmatpush1.xpose.msra.mxu0 %v370
    %742 = vmatprep.subr.mxu0 0.0
    %743 = vmatpush1.xpose.msra.mxu0 %v373
    %744 = vmatprep.subr.mxu0 0.0
    %745 = vmatpush1.xpose.msra.mxu0 %v376
    %746 = vmatprep.subr.mxu0 0.0
    %747 = vmatpush1.xpose.msra.mxu0 %v379
    %748 = vmatprep.subr.mxu0 0.0
    %749 = vmatpush1.xpose.msra.mxu0 %v382
    %750 = vmatprep.subr.mxu0 0.0
    %751 = vmatpush1.xpose.msra.mxu0 %v385
    %752 = vmatprep.subr.mxu0 0.0
    %753 = vmatpush1.xpose.msra.mxu0 %v388
    %754 = vmatprep.subr.mxu0 0.0
    %755 = vmatpush1.xpose.msra.mxu0 %v391
    %756 = vmatprep.subr.mxu0 0.0
    %757 = vmatpush1.xpose.msra.mxu0 %v394
    %758 = vmatprep.subr.mxu0 0.0
    %759 = vmatpush1.xpose.msra.mxu0 %v397
    %760 = vmatprep.subr.mxu0 0.0
    %761 = vmatpush1.xpose.msra.mxu0 %v400
    %762 = vmatprep.subr.mxu0 0.0
    %763 = vmatpush1.xpose.msra.mxu0 %v403
    %764 = vmatprep.subr.mxu0 0.0
    %765 = vmatpush1.xpose.msra.mxu0 %v406
    %766 = vmatprep.subr.mxu0 0.0
    %767 = vmatpush1.xpose.msra.mxu0 %v409
    %768 = vmatprep.subr.mxu0 0.0
    %769 = vmatpush1.xpose.msra.mxu0 %v412
    %770 = vmatprep.subr.mxu0 0.0
    %771 = vmatpush1.xpose.msra.mxu0 %v415
    %772 = vmatprep.subr.mxu0 0.0
    %773 = vmatpush1.xpose.msra.mxu0 %v418
    %774 = vmatprep.subr.mxu0 0.0
    %775 = vmatpush1.xpose.msra.mxu0 %v421
    %776 = vmatprep.subr.mxu0 0.0
    %777 = vmatpush1.xpose.msra.mxu0 %v424
    %778 = vmatprep.mubr.f32.mxu0 0.0
    %779 = vmatmul.mubr.f32.gmra.mrb[0].mxu0 %v283
    %v780 = vpop.f32.mrb[0].mxu0
    %v781 = vadd.f32 %v204, %v780
    %v782 = vpop.f32.mrb[0].mxu0
    %v783 = vadd.f32 %v204, %v782
    %784 = vmatprep.mubr.f32.mxu0 0.0
    %785 = vmatmul.mubr.f32.gmra.mrb[0].mxu0 %v286
    %v786 = vpop.f32.mrb[0].mxu0
    %v787 = vadd.f32 %v209, %v786
    %v788 = vpop.f32.mrb[0].mxu0
    %v789 = vadd.f32 %v209, %v788
    %790 = vmatprep.mubr.f32.mxu0 0.0
    %791 = vmatmul.mubr.f32.gmra.mrb[0].mxu0 %v289
    %v792 = vpop.f32.mrb[0].mxu0
    %v793 = vadd.f32 %v214, %v792
    %v794 = vpop.f32.mrb[0].mxu0
    %v795 = vadd.f32 %v214, %v794
    %796 = vmatprep.mubr.f32.mxu0 0.0
    %797 = vmatmul.mubr.f32.gmra.mrb[0].mxu0 %v292
    %v798 = vpop.f32.mrb[0].mxu0
    %v799 = vadd.f32 %v219, %v798
    %v800 = vpop.f32.mrb[0].mxu0
    %v801 = vadd.f32 %v219, %v800
    %802 = vmatprep.mubr.f32.mxu0 0.0
    %803 = vmatmul.mubr.f32.gmra.mrb[0].mxu0 %v295
    %v804 = vpop.f32.mrb[0].mxu0
    %v805 = vadd.f32 %v224, %v804
    %v806 = vpop.f32.mrb[0].mxu0
    %v807 = vadd.f32 %v224, %v806
    %808 = vmatprep.mubr.f32.mxu0 0.0
    %809 = vmatmul.mubr.f32.gmra.mrb[0].mxu0 %v298
    %v810 = vpop.f32.mrb[0].mxu0
    %v811 = vadd.f32 %v229, %v810
    %v812 = vpop.f32.mrb[0].mxu0
    %v813 = vadd.f32 %v229, %v812
    %814 = vmatprep.mubr.f32.mxu0 0.0
    %815 = vmatmul.mubr.f32.gmra.mrb[0].mxu0 %v301
    %v816 = vpop.f32.mrb[0].mxu0
    %v817 = vadd.f32 %v234, %v816
    %v818 = vpop.f32.mrb[0].mxu0
    %v819 = vadd.f32 %v234, %v818
    %820 = vmatprep.mubr.f32.mxu0 0.0
    %821 = vmatmul.mubr.f32.gmra.mrb[0].mxu0 %v304
    %v822 = vpop.f32.mrb[0].mxu0
    %v823 = vadd.f32 %v239, %v822
    %v824 = vpop.f32.mrb[0].mxu0
    %v825 = vadd.f32 %v239, %v824
    %826 = vmatprep.mubr.f32.mxu0 0.0
    %827 = vmatmul.mubr.f32.gmra.mrb[0].mxu0 %v307
    %v828 = vpop.f32.mrb[0].mxu0
    %v829 = vadd.f32 %v244, %v828
    %v830 = vpop.f32.mrb[0].mxu0
    %v831 = vadd.f32 %v244, %v830
    %832 = vmatprep.mubr.f32.mxu0 0.0
    %833 = vmatmul.mubr.f32.gmra.mrb[0].mxu0 %v310
    %v834 = vpop.f32.mrb[0].mxu0
    %v835 = vadd.f32 %v249, %v834
    %v836 = vpop.f32.mrb[0].mxu0
    %v837 = vadd.f32 %v249, %v836
    %838 = vmatprep.mubr.f32.mxu0 0.0
    %839 = vmatmul.mubr.f32.gmra.mrb[0].mxu0 %v313
    %v840 = vpop.f32.mrb[0].mxu0
    %v841 = vadd.f32 %v254, %v840
    %v842 = vpop.f32.mrb[0].mxu0
    %v843 = vadd.f32 %v254, %v842
    %844 = vmatprep.mubr.f32.mxu0 0.0
    %845 = vmatmul.mubr.f32.gmra.mrb[0].mxu0 %v316
    %v846 = vpop.f32.mrb[0].mxu0
    %v847 = vadd.f32 %v259, %v846
    %v848 = vpop.f32.mrb[0].mxu0
    %v849 = vadd.f32 %v259, %v848
    %850 = vmatprep.mubr.f32.mxu0 0.0
    %851 = vmatmul.mubr.f32.gmra.mrb[0].mxu0 %v319
    %v852 = vpop.f32.mrb[0].mxu0
    %v853 = vadd.f32 %v264, %v852
    %v854 = vpop.f32.mrb[0].mxu0
    %v855 = vadd.f32 %v264, %v854
    %856 = vmatprep.mubr.f32.mxu0 0.0
    %857 = vmatmul.mubr.f32.gmra.mrb[0].mxu0 %v322
    %v858 = vpop.f32.mrb[0].mxu0
    %v859 = vadd.f32 %v269, %v858
    %v860 = vpop.f32.mrb[0].mxu0
    %v861 = vadd.f32 %v269, %v860
    %862 = vmatprep.mubr.f32.mxu0 0.0
    %863 = vmatmul.mubr.f32.gmra.mrb[0].mxu0 %v325
    %v864 = vpop.f32.mrb[0].mxu0
    %v865 = vadd.f32 %v274, %v864
    %v866 = vpop.f32.mrb[0].mxu0
    %v867 = vadd.f32 %v274, %v866
    %868 = vmatprep.mubr.f32.mxu0 0.0
    %869 = vmatmul.mubr.f32.gmra.mrb[0].mxu0 %v328
    %v870 = vpop.f32.mrb[0].mxu0
    %v871 = vadd.f32 %v279, %v870
    %v872 = vpop.f32.mrb[0].mxu0
    %v873 = vadd.f32 %v279, %v872
    %874 = vdwg.mxu0
    %875 = vmatprep.subr.mxu0 0.0
    %876 = vmatpush1.xpose.msra.mxu0 %v427
    %877 = vmatprep.subr.mxu0 0.0
    %878 = vmatpush1.xpose.msra.mxu0 %v430
    %879 = vmatprep.subr.mxu0 0.0
    %880 = vmatpush1.xpose.msra.mxu0 %v433
    %881 = vmatprep.subr.mxu0 0.0
    %882 = vmatpush1.xpose.msra.mxu0 %v436
    %883 = vmatprep.subr.mxu0 0.0
    %884 = vmatpush1.xpose.msra.mxu0 %v439
    %885 = vmatprep.subr.mxu0 0.0
    %886 = vmatpush1.xpose.msra.mxu0 %v442
    %887 = vmatprep.subr.mxu0 0.0
    %888 = vmatpush1.xpose.msra.mxu0 %v445
    %889 = vmatprep.subr.mxu0 0.0
    %890 = vmatpush1.xpose.msra.mxu0 %v448
    %891 = vmatprep.subr.mxu0 0.0
    %892 = vmatpush1.xpose.msra.mxu0 %v451
    %893 = vmatprep.subr.mxu0 0.0
    %894 = vmatpush1.xpose.msra.mxu0 %v454
    %895 = vmatprep.subr.mxu0 0.0
    %896 = vmatpush1.xpose.msra.mxu0 %v457
    %897 = vmatprep.subr.mxu0 0.0
    %898 = vmatpush1.xpose.msra.mxu0 %v460
    %899 = vmatprep.subr.mxu0 0.0
    %900 = vmatpush1.xpose.msra.mxu0 %v463
    %901 = vmatprep.subr.mxu0 0.0
    %902 = vmatpush1.xpose.msra.mxu0 %v466
    %903 = vmatprep.subr.mxu0 0.0
    %904 = vmatpush1.xpose.msra.mxu0 %v469
    %905 = vmatprep.subr.mxu0 0.0
    %906 = vmatpush1.xpose.msra.mxu0 %v472
    %907 = vmatprep.subr.mxu0 0.0
    %908 = vmatpush1.xpose.msra.mxu0 %v475
    %909 = vmatprep.subr.mxu0 0.0
    %910 = vmatpush1.xpose.msra.mxu0 %v478
    %911 = vmatprep.subr.mxu0 0.0
    %912 = vmatpush1.xpose.msra.mxu0 %v481
    %913 = vmatprep.subr.mxu0 0.0
    %914 = vmatpush1.xpose.msra.mxu0 %v484
    %915 = vmatprep.subr.mxu0 0.0
    %916 = vmatpush1.xpose.msra.mxu0 %v487
    %917 = vmatprep.subr.mxu0 0.0
    %918 = vmatpush1.xpose.msra.mxu0 %v490
    %919 = vmatprep.subr.mxu0 0.0
    %920 = vmatpush1.xpose.msra.mxu0 %v493
    %921 = vmatprep.subr.mxu0 0.0
    %922 = vmatpush1.xpose.msra.mxu0 %v496
    %923 = vmatprep.subr.mxu0 0.0
    %924 = vmatpush1.xpose.msra.mxu0 %v499
    %925 = vmatprep.subr.mxu0 0.0
    %926 = vmatpush1.xpose.msra.mxu0 %v502
    %927 = vmatprep.subr.mxu0 0.0
    %928 = vmatpush1.xpose.msra.mxu0 %v505
    %929 = vmatprep.subr.mxu0 0.0
    %930 = vmatpush1.xpose.msra.mxu0 %v508
    %931 = vmatprep.subr.mxu0 0.0
    %932 = vmatpush1.xpose.msra.mxu0 %v511
    %933 = vmatprep.subr.mxu0 0.0
    %934 = vmatpush1.xpose.msra.mxu0 %v514
    %935 = vmatprep.subr.mxu0 0.0
    %936 = vmatpush1.xpose.msra.mxu0 %v517
    %937 = vmatprep.subr.mxu0 0.0
    %938 = vmatpush1.xpose.msra.mxu0 %v520
    %939 = vmatprep.mubr.f32.mxu0 0.0
    %940 = vmatmul.mubr.f32.gmra.mrb[0].mxu0 %v283
    %v941 = vpop.f32.mrb[0].mxu0
    %v942 = vadd.f32 %v204, %v941
    %v943 = vpop.f32.mrb[0].mxu0
    %v944 = vadd.f32 %v204, %v943
    %945 = vmatprep.mubr.f32.mxu0 0.0
    %946 = vmatmul.mubr.f32.gmra.mrb[0].mxu0 %v286
    %v947 = vpop.f32.mrb[0].mxu0
    %v948 = vadd.f32 %v209, %v947
    %v949 = vpop.f32.mrb[0].mxu0
    %v950 = vadd.f32 %v209, %v949
    %951 = vmatprep.mubr.f32.mxu0 0.0
    %952 = vmatmul.mubr.f32.gmra.mrb[0].mxu0 %v289
    %v953 = vpop.f32.mrb[0].mxu0
    %v954 = vadd.f32 %v214, %v953
    %v955 = vpop.f32.mrb[0].mxu0
    %v956 = vadd.f32 %v214, %v955
    %957 = vmatprep.mubr.f32.mxu0 0.0
    %958 = vmatmul.mubr.f32.gmra.mrb[0].mxu0 %v292
    %v959 = vpop.f32.mrb[0].mxu0
    %v960 = vadd.f32 %v219, %v959
    %v961 = vpop.f32.mrb[0].mxu0
    %v962 = vadd.f32 %v219, %v961
    %963 = vmatprep.mubr.f32.mxu0 0.0
    %964 = vmatmul.mubr.f32.gmra.mrb[0].mxu0 %v295
    %v965 = vpop.f32.mrb[0].mxu0
    %v966 = vadd.f32 %v224, %v965
    %v967 = vpop.f32.mrb[0].mxu0
    %v968 = vadd.f32 %v224, %v967
    %969 = vmatprep.mubr.f32.mxu0 0.0
    %970 = vmatmul.mubr.f32.gmra.mrb[0].mxu0 %v298
    %v971 = vpop.f32.mrb[0].mxu0
    %v972 = vadd.f32 %v229, %v971
    %v973 = vpop.f32.mrb[0].mxu0
    %v974 = vadd.f32 %v229, %v973
    %975 = vmatprep.mubr.f32.mxu0 0.0
    %976 = vmatmul.mubr.f32.gmra.mrb[0].mxu0 %v301
    %v977 = vpop.f32.mrb[0].mxu0
    %v978 = vadd.f32 %v234, %v977
    %v979 = vpop.f32.mrb[0].mxu0
    %v980 = vadd.f32 %v234, %v979
    %981 = vmatprep.mubr.f32.mxu0 0.0
    %982 = vmatmul.mubr.f32.gmra.mrb[0].mxu0 %v304
    %v983 = vpop.f32.mrb[0].mxu0
    %v984 = vadd.f32 %v239, %v983
    %v985 = vpop.f32.mrb[0].mxu0
    %v986 = vadd.f32 %v239, %v985
    %987 = vmatprep.mubr.f32.mxu0 0.0
    %988 = vmatmul.mubr.f32.gmra.mrb[0].mxu0 %v307
    %v989 = vpop.f32.mrb[0].mxu0
    %v990 = vadd.f32 %v244, %v989
    %v991 = vpop.f32.mrb[0].mxu0
    %v992 = vadd.f32 %v244, %v991
    %993 = vmatprep.mubr.f32.mxu0 0.0
    %994 = vmatmul.mubr.f32.gmra.mrb[0].mxu0 %v310
    %v995 = vpop.f32.mrb[0].mxu0
    %v996 = vadd.f32 %v249, %v995
    %v997 = vpop.f32.mrb[0].mxu0
    %v998 = vadd.f32 %v249, %v997
    %999 = vmatprep.mubr.f32.mxu0 0.0
    %1000 = vmatmul.mubr.f32.gmra.mrb[0].mxu0 %v313
    %v1001 = vpop.f32.mrb[0].mxu0
    %v1002 = vadd.f32 %v254, %v1001
    %v1003 = vpop.f32.mrb[0].mxu0
    %v1004 = vadd.f32 %v254, %v1003
    %1005 = vmatprep.mubr.f32.mxu0 0.0
    %1006 = vmatmul.mubr.f32.gmra.mrb[0].mxu0 %v316
    %v1007 = vpop.f32.mrb[0].mxu0
    %v1008 = vadd.f32 %v259, %v1007
    %v1009 = vpop.f32.mrb[0].mxu0
    %v1010 = vadd.f32 %v259, %v1009
    %1011 = vmatprep.mubr.f32.mxu0 0.0
    %1012 = vmatmul.mubr.f32.gmra.mrb[0].mxu0 %v319
    %v1013 = vpop.f32.mrb[0].mxu0
    %v1014 = vadd.f32 %v264, %v1013
    %v1015 = vpop.f32.mrb[0].mxu0
    %v1016 = vadd.f32 %v264, %v1015
    %1017 = vmatprep.mubr.f32.mxu0 0.0
    %1018 = vmatmul.mubr.f32.gmra.mrb[0].mxu0 %v322
    %v1019 = vpop.f32.mrb[0].mxu0
    %v1020 = vadd.f32 %v269, %v1019
    %v1021 = vpop.f32.mrb[0].mxu0
    %v1022 = vadd.f32 %v269, %v1021
    %1023 = vmatprep.mubr.f32.mxu0 0.0
    %1024 = vmatmul.mubr.f32.gmra.mrb[0].mxu0 %v325
    %v1025 = vpop.f32.mrb[0].mxu0
    %v1026 = vadd.f32 %v274, %v1025
    %v1027 = vpop.f32.mrb[0].mxu0
    %v1028 = vadd.f32 %v274, %v1027
    %1029 = vmatprep.mubr.f32.mxu0 0.0
    %1030 = vmatmul.mubr.f32.gmra.mrb[0].mxu0 %v328
    %v1031 = vpop.f32.mrb[0].mxu0
    %v1032 = vadd.f32 %v279, %v1031
    %v1033 = vpop.f32.mrb[0].mxu0
    %v1034 = vadd.f32 %v279, %v1033
    %1035 = vdwg.mxu0
    %1036 = vmatprep.subr.mxu0 0.0
    %1037 = vmatpush1.xpose.msra.mxu0 %v523
    %1038 = vmatprep.subr.mxu0 0.0
    %1039 = vmatpush1.xpose.msra.mxu0 %v526
    %1040 = vmatprep.subr.mxu0 0.0
    %1041 = vmatpush1.xpose.msra.mxu0 %v529
    %1042 = vmatprep.subr.mxu0 0.0
    %1043 = vmatpush1.xpose.msra.mxu0 %v532
    %1044 = vmatprep.subr.mxu0 0.0
    %1045 = vmatpush1.xpose.msra.mxu0 %v535
    %1046 = vmatprep.subr.mxu0 0.0
    %1047 = vmatpush1.xpose.msra.mxu0 %v538
    %1048 = vmatprep.subr.mxu0 0.0
    %1049 = vmatpush1.xpose.msra.mxu0 %v541
    %1050 = vmatprep.subr.mxu0 0.0
    %1051 = vmatpush1.xpose.msra.mxu0 %v544
    %1052 = vmatprep.subr.mxu0 0.0
    %1053 = vmatpush1.xpose.msra.mxu0 %v547
    %1054 = vmatprep.subr.mxu0 0.0
    %1055 = vmatpush1.xpose.msra.mxu0 %v550
    %1056 = vmatprep.subr.mxu0 0.0
    %1057 = vmatpush1.xpose.msra.mxu0 %v553
    %1058 = vmatprep.subr.mxu0 0.0
    %1059 = vmatpush1.xpose.msra.mxu0 %v556
    %1060 = vmatprep.subr.mxu0 0.0
    %1061 = vmatpush1.xpose.msra.mxu0 %v559
    %1062 = vmatprep.subr.mxu0 0.0
    %1063 = vmatpush1.xpose.msra.mxu0 %v562
    %1064 = vmatprep.subr.mxu0 0.0
    %1065 = vmatpush1.xpose.msra.mxu0 %v565
    %1066 = vmatprep.subr.mxu0 0.0
    %1067 = vmatpush1.xpose.msra.mxu0 %v568
    %1068 = vmatprep.subr.mxu0 0.0
    %1069 = vmatpush1.xpose.msra.mxu0 %v571
    %1070 = vmatprep.subr.mxu0 0.0
    %1071 = vmatpush1.xpose.msra.mxu0 %v574
    %1072 = vmatprep.subr.mxu0 0.0
    %1073 = vmatpush1.xpose.msra.mxu0 %v577
    %1074 = vmatprep.subr.mxu0 0.0
    %1075 = vmatpush1.xpose.msra.mxu0 %v580
    %1076 = vmatprep.subr.mxu0 0.0
    %1077 = vmatpush1.xpose.msra.mxu0 %v583
    %1078 = vmatprep.subr.mxu0 0.0
    %1079 = vmatpush1.xpose.msra.mxu0 %v586
    %1080 = vmatprep.subr.mxu0 0.0
    %1081 = vmatpush1.xpose.msra.mxu0 %v589
    %1082 = vmatprep.subr.mxu0 0.0
    %1083 = vmatpush1.xpose.msra.mxu0 %v592
    %1084 = vmatprep.subr.mxu0 0.0
    %1085 = vmatpush1.xpose.msra.mxu0 %v595
    %1086 = vmatprep.subr.mxu0 0.0
    %1087 = vmatpush1.xpose.msra.mxu0 %v598
    %1088 = vmatprep.subr.mxu0 0.0
    %1089 = vmatpush1.xpose.msra.mxu0 %v601
    %1090 = vmatprep.subr.mxu0 0.0
    %1091 = vmatpush1.xpose.msra.mxu0 %v604
    %1092 = vmatprep.subr.mxu0 0.0
    %1093 = vmatpush1.xpose.msra.mxu0 %v607
    %1094 = vmatprep.subr.mxu0 0.0
    %1095 = vmatpush1.xpose.msra.mxu0 %v610
    %1096 = vmatprep.subr.mxu0 0.0
    %1097 = vmatpush1.xpose.msra.mxu0 %v613
    %1098 = vmatprep.subr.mxu0 0.0
    %1099 = vmatpush1.xpose.msra.mxu0 %v616
    %1100 = vmatprep.mubr.f32.mxu0 0.0
    %1101 = vmatmul.mubr.f32.gmra.mrb[0].mxu0 %v283
    %v1102 = vpop.f32.mrb[0].mxu0
    %v1103 = vadd.f32 %v204, %v1102
    %v1104 = vpop.f32.mrb[0].mxu0
    %v1105 = vadd.f32 %v204, %v1104
    %1106 = vmatprep.mubr.f32.mxu0 0.0
    %1107 = vmatmul.mubr.f32.gmra.mrb[0].mxu0 %v286
    %v1108 = vpop.f32.mrb[0].mxu0
    %v1109 = vadd.f32 %v209, %v1108
    %v1110 = vpop.f32.mrb[0].mxu0
    %v1111 = vadd.f32 %v209, %v1110
    %1112 = vmatprep.mubr.f32.mxu0 0.0
    %1113 = vmatmul.mubr.f32.gmra.mrb[0].mxu0 %v289
    %v1114 = vpop.f32.mrb[0].mxu0
    %v1115 = vadd.f32 %v214, %v1114
    %v1116 = vpop.f32.mrb[0].mxu0
    %v1117 = vadd.f32 %v214, %v1116
    %1118 = vmatprep.mubr.f32.mxu0 0.0
    %1119 = vmatmul.mubr.f32.gmra.mrb[0].mxu0 %v292
    %v1120 = vpop.f32.mrb[0].mxu0
    %v1121 = vadd.f32 %v219, %v1120
    %v1122 = vpop.f32.mrb[0].mxu0
    %v1123 = vadd.f32 %v219, %v1122
    %1124 = vmatprep.mubr.f32.mxu0 0.0
    %1125 = vmatmul.mubr.f32.gmra.mrb[0].mxu0 %v295
    %v1126 = vpop.f32.mrb[0].mxu0
    %v1127 = vadd.f32 %v224, %v1126
    %v1128 = vpop.f32.mrb[0].mxu0
    %v1129 = vadd.f32 %v224, %v1128
    %1130 = vmatprep.mubr.f32.mxu0 0.0
    %1131 = vmatmul.mubr.f32.gmra.mrb[0].mxu0 %v298
    %v1132 = vpop.f32.mrb[0].mxu0
    %v1133 = vadd.f32 %v229, %v1132
    %v1134 = vpop.f32.mrb[0].mxu0
    %v1135 = vadd.f32 %v229, %v1134
    %1136 = vmatprep.mubr.f32.mxu0 0.0
    %1137 = vmatmul.mubr.f32.gmra.mrb[0].mxu0 %v301
    %v1138 = vpop.f32.mrb[0].mxu0
    %v1139 = vadd.f32 %v234, %v1138
    %v1140 = vpop.f32.mrb[0].mxu0
    %v1141 = vadd.f32 %v234, %v1140
    %1142 = vmatprep.mubr.f32.mxu0 0.0
    %1143 = vmatmul.mubr.f32.gmra.mrb[0].mxu0 %v304
    %v1144 = vpop.f32.mrb[0].mxu0
    %v1145 = vadd.f32 %v239, %v1144
    %v1146 = vpop.f32.mrb[0].mxu0
    %v1147 = vadd.f32 %v239, %v1146
    %1148 = vmatprep.mubr.f32.mxu0 0.0
    %1149 = vmatmul.mubr.f32.gmra.mrb[0].mxu0 %v307
    %v1150 = vpop.f32.mrb[0].mxu0
    %v1151 = vadd.f32 %v244, %v1150
    %v1152 = vpop.f32.mrb[0].mxu0
    %v1153 = vadd.f32 %v244, %v1152
    %1154 = vmatprep.mubr.f32.mxu0 0.0
    %1155 = vmatmul.mubr.f32.gmra.mrb[0].mxu0 %v310
    %v1156 = vpop.f32.mrb[0].mxu0
    %v1157 = vadd.f32 %v249, %v1156
    %v1158 = vpop.f32.mrb[0].mxu0
    %v1159 = vadd.f32 %v249, %v1158
    %1160 = vmatprep.mubr.f32.mxu0 0.0
    %1161 = vmatmul.mubr.f32.gmra.mrb[0].mxu0 %v313
    %v1162 = vpop.f32.mrb[0].mxu0
    %v1163 = vadd.f32 %v254, %v1162
    %v1164 = vpop.f32.mrb[0].mxu0
    %v1165 = vadd.f32 %v254, %v1164
    %1166 = vmatprep.mubr.f32.mxu0 0.0
    %1167 = vmatmul.mubr.f32.gmra.mrb[0].mxu0 %v316
    %v1168 = vpop.f32.mrb[0].mxu0
    %v1169 = vadd.f32 %v259, %v1168
    %v1170 = vpop.f32.mrb[0].mxu0
    %v1171 = vadd.f32 %v259, %v1170
    %1172 = vmatprep.mubr.f32.mxu0 0.0
    %1173 = vmatmul.mubr.f32.gmra.mrb[0].mxu0 %v319
    %v1174 = vpop.f32.mrb[0].mxu0
    %v1175 = vadd.f32 %v264, %v1174
    %v1176 = vpop.f32.mrb[0].mxu0
    %v1177 = vadd.f32 %v264, %v1176
    %1178 = vmatprep.mubr.f32.mxu0 0.0
    %1179 = vmatmul.mubr.f32.gmra.mrb[0].mxu0 %v322
    %v1180 = vpop.f32.mrb[0].mxu0
    %v1181 = vadd.f32 %v269, %v1180
    %v1182 = vpop.f32.mrb[0].mxu0
    %v1183 = vadd.f32 %v269, %v1182
    %1184 = vmatprep.mubr.f32.mxu0 0.0
    %1185 = vmatmul.mubr.f32.gmra.mrb[0].mxu0 %v325
    %v1186 = vpop.f32.mrb[0].mxu0
    %v1187 = vadd.f32 %v274, %v1186
    %v1188 = vpop.f32.mrb[0].mxu0
    %v1189 = vadd.f32 %v274, %v1188
    %1190 = vmatprep.mubr.f32.mxu0 0.0
    %1191 = vmatmul.mubr.f32.gmra.mrb[0].mxu0 %v328
    %v1192 = vpop.f32.mrb[0].mxu0
    %v1193 = vadd.f32 %v279, %v1192
    %v1194 = vpop.f32.mrb[0].mxu0
    %v1195 = vadd.f32 %v279, %v1194
    %1196 = vdwg.mxu0
    %1197 = vmatprep.subr.mxu0 0.0
    %1198 = vmatpush1.xpose.msra.mxu0 %v619
    %1199 = vmatprep.subr.mxu0 0.0
    %1200 = vmatpush1.xpose.msra.mxu0 %v622
    %1201 = vmatprep.subr.mxu0 0.0
    %1202 = vmatpush1.xpose.msra.mxu0 %v625
    %1203 = vmatprep.subr.mxu0 0.0
    %1204 = vmatpush1.xpose.msra.mxu0 %v628
    %1205 = vmatprep.subr.mxu0 0.0
    %1206 = vmatpush1.xpose.msra.mxu0 %v631
    %1207 = vmatprep.subr.mxu0 0.0
    %1208 = vmatpush1.xpose.msra.mxu0 %v634
    %1209 = vmatprep.subr.mxu0 0.0
    %1210 = vmatpush1.xpose.msra.mxu0 %v637
    %1211 = vmatprep.subr.mxu0 0.0
    %1212 = vmatpush1.xpose.msra.mxu0 %v640
    %1213 = vmatprep.subr.mxu0 0.0
    %1214 = vmatpush1.xpose.msra.mxu0 %v643
    %1215 = vmatprep.subr.mxu0 0.0
    %1216 = vmatpush1.xpose.msra.mxu0 %v646
    %1217 = vmatprep.subr.mxu0 0.0
    %1218 = vmatpush1.xpose.msra.mxu0 %v649
    %1219 = vmatprep.subr.mxu0 0.0
    %1220 = vmatpush1.xpose.msra.mxu0 %v652
    %1221 = vmatprep.subr.mxu0 0.0
    %1222 = vmatpush1.xpose.msra.mxu0 %v655
    %1223 = vmatprep.subr.mxu0 0.0
    %1224 = vmatpush1.xpose.msra.mxu0 %v658
    %1225 = vmatprep.subr.mxu0 0.0
    %1226 = vmatpush1.xpose.msra.mxu0 %v661
    %1227 = vmatprep.subr.mxu0 0.0
    %1228 = vmatpush1.xpose.msra.mxu0 %v664
    %1229 = vmatprep.subr.mxu0 0.0
    %1230 = vmatpush1.xpose.msra.mxu0 %v667
    %1231 = vmatprep.subr.mxu0 0.0
    %1232 = vmatpush1.xpose.msra.mxu0 %v670
    %1233 = vmatprep.subr.mxu0 0.0
    %1234 = vmatpush1.xpose.msra.mxu0 %v673
    %1235 = vmatprep.subr.mxu0 0.0
    %1236 = vmatpush1.xpose.msra.mxu0 %v676
    %1237 = vmatprep.subr.mxu0 0.0
    %1238 = vmatpush1.xpose.msra.mxu0 %v679
    %1239 = vmatprep.subr.mxu0 0.0
    %1240 = vmatpush1.xpose.msra.mxu0 %v682
    %1241 = vmatprep.subr.mxu0 0.0
    %1242 = vmatpush1.xpose.msra.mxu0 %v685
    %1243 = vmatprep.subr.mxu0 0.0
    %1244 = vmatpush1.xpose.msra.mxu0 %v688
    %1245 = vmatprep.subr.mxu0 0.0
    %1246 = vmatpush1.xpose.msra.mxu0 %v691
    %1247 = vmatprep.subr.mxu0 0.0
    %1248 = vmatpush1.xpose.msra.mxu0 %v694
    %1249 = vmatprep.subr.mxu0 0.0
    %1250 = vmatpush1.xpose.msra.mxu0 %v697
    %1251 = vmatprep.subr.mxu0 0.0
    %1252 = vmatpush1.xpose.msra.mxu0 %v700
    %1253 = vmatprep.subr.mxu0 0.0
    %1254 = vmatpush1.xpose.msra.mxu0 %v703
    %1255 = vmatprep.subr.mxu0 0.0
    %1256 = vmatpush1.xpose.msra.mxu0 %v706
    %1257 = vmatprep.subr.mxu0 0.0
    %1258 = vmatpush1.xpose.msra.mxu0 %v709
    %1259 = vmatprep.subr.mxu0 0.0
    %1260 = vmatpush1.xpose.msra.mxu0 %v712
    %1261 = vmatprep.mubr.f32.mxu0 0.0
    %1262 = vmatmul.mubr.f32.gmra.mrb[0].mxu0 %v283
    %v1263 = vpop.f32.mrb[0].mxu0
    %v1264 = vadd.f32 %v204, %v1263
    %v1265 = vpop.f32.mrb[0].mxu0
    %v1266 = vadd.f32 %v204, %v1265
    %1267 = vmatprep.mubr.f32.mxu0 0.0
    %1268 = vmatmul.mubr.f32.gmra.mrb[0].mxu0 %v286
    %v1269 = vpop.f32.mrb[0].mxu0
    %v1270 = vadd.f32 %v209, %v1269
    %v1271 = vpop.f32.mrb[0].mxu0
    %v1272 = vadd.f32 %v209, %v1271
    %1273 = vmatprep.mubr.f32.mxu0 0.0
    %1274 = vmatmul.mubr.f32.gmra.mrb[0].mxu0 %v289
    %v1275 = vpop.f32.mrb[0].mxu0
    %v1276 = vadd.f32 %v214, %v1275
    %v1277 = vpop.f32.mrb[0].mxu0
    %v1278 = vadd.f32 %v214, %v1277
    %1279 = vmatprep.mubr.f32.mxu0 0.0
    %1280 = vmatmul.mubr.f32.gmra.mrb[0].mxu0 %v292
    %v1281 = vpop.f32.mrb[0].mxu0
    %v1282 = vadd.f32 %v219, %v1281
    %v1283 = vpop.f32.mrb[0].mxu0
    %v1284 = vadd.f32 %v219, %v1283
    %1285 = vmatprep.mubr.f32.mxu0 0.0
    %1286 = vmatmul.mubr.f32.gmra.mrb[0].mxu0 %v295
    %v1287 = vpop.f32.mrb[0].mxu0
    %v1288 = vadd.f32 %v224, %v1287
    %v1289 = vpop.f32.mrb[0].mxu0
    %v1290 = vadd.f32 %v224, %v1289
    %1291 = vmatprep.mubr.f32.mxu0 0.0
    %1292 = vmatmul.mubr.f32.gmra.mrb[0].mxu0 %v298
    %v1293 = vpop.f32.mrb[0].mxu0
    %v1294 = vadd.f32 %v229, %v1293
    %v1295 = vpop.f32.mrb[0].mxu0
    %v1296 = vadd.f32 %v229, %v1295
    %1297 = vmatprep.mubr.f32.mxu0 0.0
    %1298 = vmatmul.mubr.f32.gmra.mrb[0].mxu0 %v301
    %v1299 = vpop.f32.mrb[0].mxu0
    %v1300 = vadd.f32 %v234, %v1299
    %v1301 = vpop.f32.mrb[0].mxu0
    %v1302 = vadd.f32 %v234, %v1301
    %1303 = vmatprep.mubr.f32.mxu0 0.0
    %1304 = vmatmul.mubr.f32.gmra.mrb[0].mxu0 %v304
    %v1305 = vpop.f32.mrb[0].mxu0
    %v1306 = vadd.f32 %v239, %v1305
    %v1307 = vpop.f32.mrb[0].mxu0
    %v1308 = vadd.f32 %v239, %v1307
    %1309 = vmatprep.mubr.f32.mxu0 0.0
    %1310 = vmatmul.mubr.f32.gmra.mrb[0].mxu0 %v307
    %v1311 = vpop.f32.mrb[0].mxu0
    %v1312 = vadd.f32 %v244, %v1311
    %v1313 = vpop.f32.mrb[0].mxu0
    %v1314 = vadd.f32 %v244, %v1313
    %1315 = vmatprep.mubr.f32.mxu0 0.0
    %1316 = vmatmul.mubr.f32.gmra.mrb[0].mxu0 %v310
    %v1317 = vpop.f32.mrb[0].mxu0
    %v1318 = vadd.f32 %v249, %v1317
    %v1319 = vpop.f32.mrb[0].mxu0
    %v1320 = vadd.f32 %v249, %v1319
    %1321 = vmatprep.mubr.f32.mxu0 0.0
    %1322 = vmatmul.mubr.f32.gmra.mrb[0].mxu0 %v313
    %v1323 = vpop.f32.mrb[0].mxu0
    %v1324 = vadd.f32 %v254, %v1323
    %v1325 = vpop.f32.mrb[0].mxu0
    %v1326 = vadd.f32 %v254, %v1325
    %1327 = vmatprep.mubr.f32.mxu0 0.0
    %1328 = vmatmul.mubr.f32.gmra.mrb[0].mxu0 %v316
    %v1329 = vpop.f32.mrb[0].mxu0
    %v1330 = vadd.f32 %v259, %v1329
    %v1331 = vpop.f32.mrb[0].mxu0
    %v1332 = vadd.f32 %v259, %v1331
    %1333 = vmatprep.mubr.f32.mxu0 0.0
    %1334 = vmatmul.mubr.f32.gmra.mrb[0].mxu0 %v319
    %v1335 = vpop.f32.mrb[0].mxu0
    %v1336 = vadd.f32 %v264, %v1335
    %v1337 = vpop.f32.mrb[0].mxu0
    %v1338 = vadd.f32 %v264, %v1337
    %1339 = vmatprep.mubr.f32.mxu0 0.0
    %1340 = vmatmul.mubr.f32.gmra.mrb[0].mxu0 %v322
    %v1341 = vpop.f32.mrb[0].mxu0
    %v1342 = vadd.f32 %v269, %v1341
    %v1343 = vpop.f32.mrb[0].mxu0
    %v1344 = vadd.f32 %v269, %v1343
    %1345 = vmatprep.mubr.f32.mxu0 0.0
    %1346 = vmatmul.mubr.f32.gmra.mrb[0].mxu0 %v325
    %v1347 = vpop.f32.mrb[0].mxu0
    %v1348 = vadd.f32 %v274, %v1347
    %v1349 = vpop.f32.mrb[0].mxu0
    %v1350 = vadd.f32 %v274, %v1349
    %1351 = vmatprep.mubr.f32.mxu0 0.0
    %1352 = vmatmul.mubr.f32.gmra.mrb[0].mxu0 %v328
    %v1353 = vpop.f32.mrb[0].mxu0
    %v1354 = vadd.f32 %v279, %v1353
    %v1355 = vpop.f32.mrb[0].mxu0
    %v1356 = vadd.f32 %v279, %v1355
    %1357 = vdwg.mxu0
    %v1358 = vmax.f32 %v781, 0.0
    %v1359 = vmax.f32 %v783, 0.0
    %v1360 = vmax.f32 %v942, 0.0
    %v1361 = vmax.f32 %v944, 0.0
    %v1362 = vmax.f32 %v1103, 0.0
    %v1363 = vmax.f32 %v1105, 0.0
    %v1364 = vmax.f32 %v1264, 0.0
    %v1365 = vmax.f32 %v1266, 0.0
    %v1366 = vmax.f32 %v787, 0.0
    %v1367 = vmax.f32 %v789, 0.0
    %v1368 = vmax.f32 %v948, 0.0
    %v1369 = vmax.f32 %v950, 0.0
    %v1370 = vmax.f32 %v1109, 0.0
    %v1371 = vmax.f32 %v1111, 0.0
    %v1372 = vmax.f32 %v1270, 0.0
    %v1373 = vmax.f32 %v1272, 0.0
    %v1374 = vmax.f32 %v793, 0.0
    %v1375 = vmax.f32 %v795, 0.0
    %v1376 = vmax.f32 %v954, 0.0
    %v1377 = vmax.f32 %v956, 0.0
    %v1378 = vmax.f32 %v1115, 0.0
    %v1379 = vmax.f32 %v1117, 0.0
    %v1380 = vmax.f32 %v1276, 0.0
    %v1381 = vmax.f32 %v1278, 0.0
    %v1382 = vmax.f32 %v799, 0.0
    %v1383 = vmax.f32 %v801, 0.0
    %v1384 = vmax.f32 %v960, 0.0
    %v1385 = vmax.f32 %v962, 0.0
    %v1386 = vmax.f32 %v1121, 0.0
    %v1387 = vmax.f32 %v1123, 0.0
    %v1388 = vmax.f32 %v1282, 0.0
    %v1389 = vmax.f32 %v1284, 0.0
    %v1390 = vmax.f32 %v805, 0.0
    %v1391 = vmax.f32 %v807, 0.0
    %v1392 = vmax.f32 %v966, 0.0
    %v1393 = vmax.f32 %v968, 0.0
    %v1394 = vmax.f32 %v1127, 0.0
    %v1395 = vmax.f32 %v1129, 0.0
    %v1396 = vmax.f32 %v1288, 0.0
    %v1397 = vmax.f32 %v1290, 0.0
    %v1398 = vmax.f32 %v811, 0.0
    %v1399 = vmax.f32 %v813, 0.0
    %v1400 = vmax.f32 %v972, 0.0
    %v1401 = vmax.f32 %v974, 0.0
    %v1402 = vmax.f32 %v1133, 0.0
    %v1403 = vmax.f32 %v1135, 0.0
    %v1404 = vmax.f32 %v1294, 0.0
    %v1405 = vmax.f32 %v1296, 0.0
    %v1406 = vmax.f32 %v817, 0.0
    %v1407 = vmax.f32 %v819, 0.0
    %v1408 = vmax.f32 %v978, 0.0
    %v1409 = vmax.f32 %v980, 0.0
    %v1410 = vmax.f32 %v1139, 0.0
    %v1411 = vmax.f32 %v1141, 0.0
    %v1412 = vmax.f32 %v1300, 0.0
    %v1413 = vmax.f32 %v1302, 0.0
    %v1414 = vmax.f32 %v823, 0.0
    %v1415 = vmax.f32 %v825, 0.0
    %v1416 = vmax.f32 %v984, 0.0
    %v1417 = vmax.f32 %v986, 0.0
    %v1418 = vmax.f32 %v1145, 0.0
    %v1419 = vmax.f32 %v1147, 0.0
    %v1420 = vmax.f32 %v1306, 0.0
    %v1421 = vmax.f32 %v1308, 0.0
    %v1422 = vmax.f32 %v829, 0.0
    %v1423 = vmax.f32 %v831, 0.0
    %v1424 = vmax.f32 %v990, 0.0
    %v1425 = vmax.f32 %v992, 0.0
    %v1426 = vmax.f32 %v1151, 0.0
    %v1427 = vmax.f32 %v1153, 0.0
    %v1428 = vmax.f32 %v1312, 0.0
    %v1429 = vmax.f32 %v1314, 0.0
    %v1430 = vmax.f32 %v835, 0.0
    %v1431 = vmax.f32 %v837, 0.0
    %v1432 = vmax.f32 %v996, 0.0
    %v1433 = vmax.f32 %v998, 0.0
    %v1434 = vmax.f32 %v1157, 0.0
    %v1435 = vmax.f32 %v1159, 0.0
    %v1436 = vmax.f32 %v1318, 0.0
    %v1437 = vmax.f32 %v1320, 0.0
    %v1438 = vmax.f32 %v841, 0.0
    %v1439 = vmax.f32 %v843, 0.0
    %v1440 = vmax.f32 %v1002, 0.0
    %v1441 = vmax.f32 %v1004, 0.0
    %v1442 = vmax.f32 %v1163, 0.0
    %v1443 = vmax.f32 %v1165, 0.0
    %v1444 = vmax.f32 %v1324, 0.0
    %v1445 = vmax.f32 %v1326, 0.0
    %v1446 = vmax.f32 %v847, 0.0
    %v1447 = vmax.f32 %v849, 0.0
    %v1448 = vmax.f32 %v1008, 0.0
    %v1449 = vmax.f32 %v1010, 0.0
    %v1450 = vmax.f32 %v1169, 0.0
    %v1451 = vmax.f32 %v1171, 0.0
    %v1452 = vmax.f32 %v1330, 0.0
    %v1453 = vmax.f32 %v1332, 0.0
    %v1454 = vmax.f32 %v853, 0.0
    %v1455 = vmax.f32 %v855, 0.0
    %v1456 = vmax.f32 %v1014, 0.0
    %v1457 = vmax.f32 %v1016, 0.0
    %v1458 = vmax.f32 %v1175, 0.0
    %v1459 = vmax.f32 %v1177, 0.0
    %v1460 = vmax.f32 %v1336, 0.0
    %v1461 = vmax.f32 %v1338, 0.0
    %v1462 = vmax.f32 %v859, 0.0
    %v1463 = vmax.f32 %v861, 0.0
    %v1464 = vmax.f32 %v1020, 0.0
    %v1465 = vmax.f32 %v1022, 0.0
    %v1466 = vmax.f32 %v1181, 0.0
    %v1467 = vmax.f32 %v1183, 0.0
    %v1468 = vmax.f32 %v1342, 0.0
    %v1469 = vmax.f32 %v1344, 0.0
    %v1470 = vmax.f32 %v865, 0.0
    %v1471 = vmax.f32 %v867, 0.0
    %v1472 = vmax.f32 %v1026, 0.0
    %v1473 = vmax.f32 %v1028, 0.0
    %v1474 = vmax.f32 %v1187, 0.0
    %v1475 = vmax.f32 %v1189, 0.0
    %v1476 = vmax.f32 %v1348, 0.0
    %v1477 = vmax.f32 %v1350, 0.0
    %v1478 = vmax.f32 %v871, 0.0
    %v1479 = vmax.f32 %v873, 0.0
    %v1480 = vmax.f32 %v1032, 0.0
    %v1481 = vmax.f32 %v1034, 0.0
    %v1482 = vmax.f32 %v1193, 0.0
    %v1483 = vmax.f32 %v1195, 0.0
    %v1484 = vmax.f32 %v1354, 0.0
    %v1485 = vmax.f32 %v1356, 0.0
    %v1486 = vld [vmem:[%s3] sm:$0xff]
    %v1487 = vld [vmem:[%s3 + $0x8] sm:$0xff]
    %v1488 = vld [vmem:[%s3 + $0x10] sm:$0xff]
    %v1489 = vld [vmem:[%s3 + $0x18] sm:$0xff]
    %v1490 = vld [vmem:[%s3 + $0x20] sm:$0xff]
    %v1491 = vld [vmem:[%s3 + $0x28] sm:$0xff]
    %v1492 = vld [vmem:[%s3 + $0x30] sm:$0xff]
    %v1493 = vld [vmem:[%s3 + $0x38] sm:$0xff]
    %v1494 = vld [vmem:[%s4] sm:$0xff]
    %v1495 = vld [vmem:[%s4 + $0x8] sm:$0xff]
    %v1496 = vld [vmem:[%s4 + $0x10] sm:$0xff]
    %v1497 = vld [vmem:[%s4 + $0x18] sm:$0xff]
    %v1498 = vld [vmem:[%s4 + $0x20] sm:$0xff]
    %v1499 = vld [vmem:[%s4 + $0x28] sm:$0xff]
    %v1500 = vld [vmem:[%s4 + $0x30] sm:$0xff]
    %v1501 = vld [vmem:[%s4 + $0x38] sm:$0xff]
    %1503 = vset.pattern.permute.xlu0 0
    %1504 = vperm.xlu0 %1503, %v1494
    %v1505 = vpop.permute.xlu0 %1504
    %1508 = vset.pattern.permute.xlu0 0
    %1509 = vperm.xlu0 %1508, %v1495
    %v1510 = vpop.permute.xlu0 %1509
    %1513 = vset.pattern.permute.xlu0 0
    %1514 = vperm.xlu0 %1513, %v1496
    %v1515 = vpop.permute.xlu0 %1514
    %1518 = vset.pattern.permute.xlu0 0
    %1519 = vperm.xlu0 %1518, %v1497
    %v1520 = vpop.permute.xlu0 %1519
    %1523 = vset.pattern.permute.xlu0 0
    %1524 = vperm.xlu0 %1523, %v1498
    %v1525 = vpop.permute.xlu0 %1524
    %1528 = vset.pattern.permute.xlu0 0
    %1529 = vperm.xlu0 %1528, %v1499
    %v1530 = vpop.permute.xlu0 %1529
    %1533 = vset.pattern.permute.xlu0 0
    %1534 = vperm.xlu0 %1533, %v1500
    %v1535 = vpop.permute.xlu0 %1534
    %1538 = vset.pattern.permute.xlu0 0
    %1539 = vperm.xlu0 %1538, %v1501
    %v1540 = vpop.permute.xlu0 %1539
    %1542 = vmatprep.subr.mxu0 %v1359
    %1543 = vmatpush1.msra.mxu0 %v1358
    %1544 = vmatprep.subr.mxu0 %v1367
    %1545 = vmatpush1.msra.mxu0 %v1366
    %1546 = vmatprep.subr.mxu0 %v1375
    %1547 = vmatpush1.msra.mxu0 %v1374
    %1548 = vmatprep.subr.mxu0 %v1383
    %1549 = vmatpush1.msra.mxu0 %v1382
    %1550 = vmatprep.subr.mxu0 %v1391
    %1551 = vmatpush1.msra.mxu0 %v1390
    %1552 = vmatprep.subr.mxu0 %v1399
    %1553 = vmatpush1.msra.mxu0 %v1398
    %1554 = vmatprep.subr.mxu0 %v1407
    %1555 = vmatpush1.msra.mxu0 %v1406
    %1556 = vmatprep.subr.mxu0 %v1415
    %1557 = vmatpush1.msra.mxu0 %v1414
    %1558 = vmatprep.subr.mxu0 %v1423
    %1559 = vmatpush1.msra.mxu0 %v1422
    %1560 = vmatprep.subr.mxu0 %v1431
    %1561 = vmatpush1.msra.mxu0 %v1430
    %1562 = vmatprep.subr.mxu0 %v1439
    %1563 = vmatpush1.msra.mxu0 %v1438
    %1564 = vmatprep.subr.mxu0 %v1447
    %1565 = vmatpush1.msra.mxu0 %v1446
    %1566 = vmatprep.subr.mxu0 %v1455
    %1567 = vmatpush1.msra.mxu0 %v1454
    %1568 = vmatprep.subr.mxu0 %v1463
    %1569 = vmatpush1.msra.mxu0 %v1462
    %1570 = vmatprep.subr.mxu0 %v1471
    %1571 = vmatpush1.msra.mxu0 %v1470
    %1572 = vmatprep.subr.mxu0 %v1479
    %1573 = vmatpush1.msra.mxu0 %v1478
    %1574 = vmatprep.subr.mxu0 0.0
    %1575 = vmatpush1.msra.mxu0 0.0
    %1576 = vmatprep.subr.mxu0 0.0
    %1577 = vmatpush1.msra.mxu0 0.0
    %1578 = vmatprep.subr.mxu0 0.0
    %1579 = vmatpush1.msra.mxu0 0.0
    %1580 = vmatprep.subr.mxu0 0.0
    %1581 = vmatpush1.msra.mxu0 0.0
    %1582 = vmatprep.subr.mxu0 0.0
    %1583 = vmatpush1.msra.mxu0 0.0
    %1584 = vmatprep.subr.mxu0 0.0
    %1585 = vmatpush1.msra.mxu0 0.0
    %1586 = vmatprep.subr.mxu0 0.0
    %1587 = vmatpush1.msra.mxu0 0.0
    %1588 = vmatprep.subr.mxu0 0.0
    %1589 = vmatpush1.msra.mxu0 0.0
    %1590 = vmatprep.subr.mxu0 0.0
    %1591 = vmatpush1.msra.mxu0 0.0
    %1592 = vmatprep.subr.mxu0 0.0
    %1593 = vmatpush1.msra.mxu0 0.0
    %1594 = vmatprep.subr.mxu0 0.0
    %1595 = vmatpush1.msra.mxu0 0.0
    %1596 = vmatprep.subr.mxu0 0.0
    %1597 = vmatpush1.msra.mxu0 0.0
    %1598 = vmatprep.subr.mxu0 0.0
    %1599 = vmatpush1.msra.mxu0 0.0
    %1600 = vmatprep.subr.mxu0 0.0
    %1601 = vmatpush1.msra.mxu0 0.0
    %1602 = vmatprep.subr.mxu0 0.0
    %1603 = vmatpush1.msra.mxu0 0.0
    %1604 = vmatprep.subr.mxu0 0.0
    %1605 = vmatpush1.msra.mxu0 0.0
    %1606 = vmatprep.mubr.f32.mxu0 0.0
    %1607 = vmatmul.mubr.f32.gmra.mrb[0].mxu0 %v1486
    %v1608 = vpop.f32.mrb[0].mxu0
    %v1609 = vadd.f32 %v1505, %v1608
    %v1610 = vpop.f32.mrb[0].mxu0
    %v1611 = vadd.f32 %v1505, %v1610
    %1612 = vmatprep.mubr.f32.mxu0 0.0
    %1613 = vmatmul.mubr.f32.gmra.mrb[0].mxu0 %v1487
    %v1614 = vpop.f32.mrb[0].mxu0
    %v1615 = vadd.f32 %v1510, %v1614
    %v1616 = vpop.f32.mrb[0].mxu0
    %v1617 = vadd.f32 %v1510, %v1616
    %1618 = vmatprep.mubr.f32.mxu0 0.0
    %1619 = vmatmul.mubr.f32.gmra.mrb[0].mxu0 %v1488
    %v1620 = vpop.f32.mrb[0].mxu0
    %v1621 = vadd.f32 %v1515, %v1620
    %v1622 = vpop.f32.mrb[0].mxu0
    %v1623 = vadd.f32 %v1515, %v1622
    %1624 = vmatprep.mubr.f32.mxu0 0.0
    %1625 = vmatmul.mubr.f32.gmra.mrb[0].mxu0 %v1489
    %v1626 = vpop.f32.mrb[0].mxu0
    %v1627 = vadd.f32 %v1520, %v1626
    %v1628 = vpop.f32.mrb[0].mxu0
    %v1629 = vadd.f32 %v1520, %v1628
    %1630 = vmatprep.mubr.f32.mxu0 0.0
    %1631 = vmatmul.mubr.f32.gmra.mrb[0].mxu0 %v1490
    %v1632 = vpop.f32.mrb[0].mxu0
    %v1633 = vadd.f32 %v1525, %v1632
    %v1634 = vpop.f32.mrb[0].mxu0
    %v1635 = vadd.f32 %v1525, %v1634
    %1636 = vmatprep.mubr.f32.mxu0 0.0
    %1637 = vmatmul.mubr.f32.gmra.mrb[0].mxu0 %v1491
    %v1638 = vpop.f32.mrb[0].mxu0
    %v1639 = vadd.f32 %v1530, %v1638
    %v1640 = vpop.f32.mrb[0].mxu0
    %v1641 = vadd.f32 %v1530, %v1640
    %1642 = vmatprep.mubr.f32.mxu0 0.0
    %1643 = vmatmul.mubr.f32.gmra.mrb[0].mxu0 %v1492
    %v1644 = vpop.f32.mrb[0].mxu0
    %v1645 = vadd.f32 %v1535, %v1644
    %v1646 = vpop.f32.mrb[0].mxu0
    %v1647 = vadd.f32 %v1535, %v1646
    %1648 = vmatprep.mubr.f32.mxu0 0.0
    %1649 = vmatmul.mubr.f32.gmra.mrb[0].mxu0 %v1493
    %v1650 = vpop.f32.mrb[0].mxu0
    %v1651 = vadd.f32 %v1540, %v1650
    %v1652 = vpop.f32.mrb[0].mxu0
    %v1653 = vadd.f32 %v1540, %v1652
    %1654 = vdwg.mxu0
    %1655 = vmatprep.subr.mxu0 %v1361
    %1656 = vmatpush1.msra.mxu0 %v1360
    %1657 = vmatprep.subr.mxu0 %v1369
    %1658 = vmatpush1.msra.mxu0 %v1368
    %1659 = vmatprep.subr.mxu0 %v1377
    %1660 = vmatpush1.msra.mxu0 %v1376
    %1661 = vmatprep.subr.mxu0 %v1385
    %1662 = vmatpush1.msra.mxu0 %v1384
    %1663 = vmatprep.subr.mxu0 %v1393
    %1664 = vmatpush1.msra.mxu0 %v1392
    %1665 = vmatprep.subr.mxu0 %v1401
    %1666 = vmatpush1.msra.mxu0 %v1400
    %1667 = vmatprep.subr.mxu0 %v1409
    %1668 = vmatpush1.msra.mxu0 %v1408
    %1669 = vmatprep.subr.mxu0 %v1417
    %1670 = vmatpush1.msra.mxu0 %v1416
    %1671 = vmatprep.subr.mxu0 %v1425
    %1672 = vmatpush1.msra.mxu0 %v1424
    %1673 = vmatprep.subr.mxu0 %v1433
    %1674 = vmatpush1.msra.mxu0 %v1432
    %1675 = vmatprep.subr.mxu0 %v1441
    %1676 = vmatpush1.msra.mxu0 %v1440
    %1677 = vmatprep.subr.mxu0 %v1449
    %1678 = vmatpush1.msra.mxu0 %v1448
    %1679 = vmatprep.subr.mxu0 %v1457
    %1680 = vmatpush1.msra.mxu0 %v1456
    %1681 = vmatprep.subr.mxu0 %v1465
    %1682 = vmatpush1.msra.mxu0 %v1464
    %1683 = vmatprep.subr.mxu0 %v1473
    %1684 = vmatpush1.msra.mxu0 %v1472
    %1685 = vmatprep.subr.mxu0 %v1481
    %1686 = vmatpush1.msra.mxu0 %v1480
    %1687 = vmatprep.subr.mxu0 0.0
    %1688 = vmatpush1.msra.mxu0 0.0
    %1689 = vmatprep.subr.mxu0 0.0
    %1690 = vmatpush1.msra.mxu0 0.0
    %1691 = vmatprep.subr.mxu0 0.0
    %1692 = vmatpush1.msra.mxu0 0.0
    %1693 = vmatprep.subr.mxu0 0.0
    %1694 = vmatpush1.msra.mxu0 0.0
    %1695 = vmatprep.subr.mxu0 0.0
    %1696 = vmatpush1.msra.mxu0 0.0
    %1697 = vmatprep.subr.mxu0 0.0
    %1698 = vmatpush1.msra.mxu0 0.0
    %1699 = vmatprep.subr.mxu0 0.0
    %1700 = vmatpush1.msra.mxu0 0.0
    %1701 = vmatprep.subr.mxu0 0.0
    %1702 = vmatpush1.msra.mxu0 0.0
    %1703 = vmatprep.subr.mxu0 0.0
    %1704 = vmatpush1.msra.mxu0 0.0
    %1705 = vmatprep.subr.mxu0 0.0
    %1706 = vmatpush1.msra.mxu0 0.0
    %1707 = vmatprep.subr.mxu0 0.0
    %1708 = vmatpush1.msra.mxu0 0.0
    %1709 = vmatprep.subr.mxu0 0.0
    %1710 = vmatpush1.msra.mxu0 0.0
    %1711 = vmatprep.subr.mxu0 0.0
    %1712 = vmatpush1.msra.mxu0 0.0
    %1713 = vmatprep.subr.mxu0 0.0
    %1714 = vmatpush1.msra.mxu0 0.0
    %1715 = vmatprep.subr.mxu0 0.0
    %1716 = vmatpush1.msra.mxu0 0.0
    %1717 = vmatprep.subr.mxu0 0.0
    %1718 = vmatpush1.msra.mxu0 0.0
    %1719 = vmatprep.mubr.f32.mxu0 0.0
    %1720 = vmatmul.mubr.f32.gmra.mrb[0].mxu0 %v1486
    %v1721 = vpop.f32.mrb[0].mxu0
    %v1722 = vadd.f32 %v1505, %v1721
    %v1723 = vpop.f32.mrb[0].mxu0
    %v1724 = vadd.f32 %v1505, %v1723
    %1725 = vmatprep.mubr.f32.mxu0 0.0
    %1726 = vmatmul.mubr.f32.gmra.mrb[0].mxu0 %v1487
    %v1727 = vpop.f32.mrb[0].mxu0
    %v1728 = vadd.f32 %v1510, %v1727
    %v1729 = vpop.f32.mrb[0].mxu0
    %v1730 = vadd.f32 %v1510, %v1729
    %1731 = vmatprep.mubr.f32.mxu0 0.0
    %1732 = vmatmul.mubr.f32.gmra.mrb[0].mxu0 %v1488
    %v1733 = vpop.f32.mrb[0].mxu0
    %v1734 = vadd.f32 %v1515, %v1733
    %v1735 = vpop.f32.mrb[0].mxu0
    %v1736 = vadd.f32 %v1515, %v1735
    %1737 = vmatprep.mubr.f32.mxu0 0.0
    %1738 = vmatmul.mubr.f32.gmra.mrb[0].mxu0 %v1489
    %v1739 = vpop.f32.mrb[0].mxu0
    %v1740 = vadd.f32 %v1520, %v1739
    %v1741 = vpop.f32.mrb[0].mxu0
    %v1742 = vadd.f32 %v1520, %v1741
    %1743 = vmatprep.mubr.f32.mxu0 0.0
    %1744 = vmatmul.mubr.f32.gmra.mrb[0].mxu0 %v1490
    %v1745 = vpop.f32.mrb[0].mxu0
    %v1746 = vadd.f32 %v1525, %v1745
    %v1747 = vpop.f32.mrb[0].mxu0
    %v1748 = vadd.f32 %v1525, %v1747
    %1749 = vmatprep.mubr.f32.mxu0 0.0
    %1750 = vmatmul.mubr.f32.gmra.mrb[0].mxu0 %v1491
    %v1751 = vpop.f32.mrb[0].mxu0
    %v1752 = vadd.f32 %v1530, %v1751
    %v1753 = vpop.f32.mrb[0].mxu0
    %v1754 = vadd.f32 %v1530, %v1753
    %1755 = vmatprep.mubr.f32.mxu0 0.0
    %1756 = vmatmul.mubr.f32.gmra.mrb[0].mxu0 %v1492
    %v1757 = vpop.f32.mrb[0].mxu0
    %v1758 = vadd.f32 %v1535, %v1757
    %v1759 = vpop.f32.mrb[0].mxu0
    %v1760 = vadd.f32 %v1535, %v1759
    %1761 = vmatprep.mubr.f32.mxu0 0.0
    %1762 = vmatmul.mubr.f32.gmra.mrb[0].mxu0 %v1493
    %v1763 = vpop.f32.mrb[0].mxu0
    %v1764 = vadd.f32 %v1540, %v1763
    %v1765 = vpop.f32.mrb[0].mxu0
    %v1766 = vadd.f32 %v1540, %v1765
    %1767 = vdwg.mxu0
    %1768 = vmatprep.subr.mxu0 %v1363
    %1769 = vmatpush1.msra.mxu0 %v1362
    %1770 = vmatprep.subr.mxu0 %v1371
    %1771 = vmatpush1.msra.mxu0 %v1370
    %1772 = vmatprep.subr.mxu0 %v1379
    %1773 = vmatpush1.msra.mxu0 %v1378
    %1774 = vmatprep.subr.mxu0 %v1387
    %1775 = vmatpush1.msra.mxu0 %v1386
    %1776 = vmatprep.subr.mxu0 %v1395
    %1777 = vmatpush1.msra.mxu0 %v1394
    %1778 = vmatprep.subr.mxu0 %v1403
    %1779 = vmatpush1.msra.mxu0 %v1402
    %1780 = vmatprep.subr.mxu0 %v1411
    %1781 = vmatpush1.msra.mxu0 %v1410
    %1782 = vmatprep.subr.mxu0 %v1419
    %1783 = vmatpush1.msra.mxu0 %v1418
    %1784 = vmatprep.subr.mxu0 %v1427
    %1785 = vmatpush1.msra.mxu0 %v1426
    %1786 = vmatprep.subr.mxu0 %v1435
    %1787 = vmatpush1.msra.mxu0 %v1434
    %1788 = vmatprep.subr.mxu0 %v1443
    %1789 = vmatpush1.msra.mxu0 %v1442
    %1790 = vmatprep.subr.mxu0 %v1451
    %1791 = vmatpush1.msra.mxu0 %v1450
    %1792 = vmatprep.subr.mxu0 %v1459
    %1793 = vmatpush1.msra.mxu0 %v1458
    %1794 = vmatprep.subr.mxu0 %v1467
    %1795 = vmatpush1.msra.mxu0 %v1466
    %1796 = vmatprep.subr.mxu0 %v1475
    %1797 = vmatpush1.msra.mxu0 %v1474
    %1798 = vmatprep.subr.mxu0 %v1483
    %1799 = vmatpush1.msra.mxu0 %v1482
    %1800 = vmatprep.subr.mxu0 0.0
    %1801 = vmatpush1.msra.mxu0 0.0
    %1802 = vmatprep.subr.mxu0 0.0
    %1803 = vmatpush1.msra.mxu0 0.0
    %1804 = vmatprep.subr.mxu0 0.0
    %1805 = vmatpush1.msra.mxu0 0.0
    %1806 = vmatprep.subr.mxu0 0.0
    %1807 = vmatpush1.msra.mxu0 0.0
    %1808 = vmatprep.subr.mxu0 0.0
    %1809 = vmatpush1.msra.mxu0 0.0
    %1810 = vmatprep.subr.mxu0 0.0
    %1811 = vmatpush1.msra.mxu0 0.0
    %1812 = vmatprep.subr.mxu0 0.0
    %1813 = vmatpush1.msra.mxu0 0.0
    %1814 = vmatprep.subr.mxu0 0.0
    %1815 = vmatpush1.msra.mxu0 0.0
    %1816 = vmatprep.subr.mxu0 0.0
    %1817 = vmatpush1.msra.mxu0 0.0
    %1818 = vmatprep.subr.mxu0 0.0
    %1819 = vmatpush1.msra.mxu0 0.0
    %1820 = vmatprep.subr.mxu0 0.0
    %1821 = vmatpush1.msra.mxu0 0.0
    %1822 = vmatprep.subr.mxu0 0.0
    %1823 = vmatpush1.msra.mxu0 0.0
    %1824 = vmatprep.subr.mxu0 0.0
    %1825 = vmatpush1.msra.mxu0 0.0
    %1826 = vmatprep.subr.mxu0 0.0
    %1827 = vmatpush1.msra.mxu0 0.0
    %1828 = vmatprep.subr.mxu0 0.0
    %1829 = vmatpush1.msra.mxu0 0.0
    %1830 = vmatprep.subr.mxu0 0.0
    %1831 = vmatpush1.msra.mxu0 0.0
    %1832 = vmatprep.mubr.f32.mxu0 0.0
    %1833 = vmatmul.mubr.f32.gmra.mrb[0].mxu0 %v1486
    %v1834 = vpop.f32.mrb[0].mxu0
    %v1835 = vadd.f32 %v1505, %v1834
    %v1836 = vpop.f32.mrb[0].mxu0
    %v1837 = vadd.f32 %v1505, %v1836
    %1838 = vmatprep.mubr.f32.mxu0 0.0
    %1839 = vmatmul.mubr.f32.gmra.mrb[0].mxu0 %v1487
    %v1840 = vpop.f32.mrb[0].mxu0
    %v1841 = vadd.f32 %v1510, %v1840
    %v1842 = vpop.f32.mrb[0].mxu0
    %v1843 = vadd.f32 %v1510, %v1842
    %1844 = vmatprep.mubr.f32.mxu0 0.0
    %1845 = vmatmul.mubr.f32.gmra.mrb[0].mxu0 %v1488
    %v1846 = vpop.f32.mrb[0].mxu0
    %v1847 = vadd.f32 %v1515, %v1846
    %v1848 = vpop.f32.mrb[0].mxu0
    %v1849 = vadd.f32 %v1515, %v1848
    %1850 = vmatprep.mubr.f32.mxu0 0.0
    %1851 = vmatmul.mubr.f32.gmra.mrb[0].mxu0 %v1489
    %v1852 = vpop.f32.mrb[0].mxu0
    %v1853 = vadd.f32 %v1520, %v1852
    %v1854 = vpop.f32.mrb[0].mxu0
    %v1855 = vadd.f32 %v1520, %v1854
    %1856 = vmatprep.mubr.f32.mxu0 0.0
    %1857 = vmatmul.mubr.f32.gmra.mrb[0].mxu0 %v1490
    %v1858 = vpop.f32.mrb[0].mxu0
    %v1859 = vadd.f32 %v1525, %v1858
    %v1860 = vpop.f32.mrb[0].mxu0
    %v1861 = vadd.f32 %v1525, %v1860
    %1862 = vmatprep.mubr.f32.mxu0 0.0
    %1863 = vmatmul.mubr.f32.gmra.mrb[0].mxu0 %v1491
    %v1864 = vpop.f32.mrb[0].mxu0
    %v1865 = vadd.f32 %v1530, %v1864
    %v1866 = vpop.f32.mrb[0].mxu0
    %v1867 = vadd.f32 %v1530, %v1866
    %1868 = vmatprep.mubr.f32.mxu0 0.0
    %1869 = vmatmul.mubr.f32.gmra.mrb[0].mxu0 %v1492
    %v1870 = vpop.f32.mrb[0].mxu0
    %v1871 = vadd.f32 %v1535, %v1870
    %v1872 = vpop.f32.mrb[0].mxu0
    %v1873 = vadd.f32 %v1535, %v1872
    %1874 = vmatprep.mubr.f32.mxu0 0.0
    %1875 = vmatmul.mubr.f32.gmra.mrb[0].mxu0 %v1493
    %v1876 = vpop.f32.mrb[0].mxu0
    %v1877 = vadd.f32 %v1540, %v1876
    %v1878 = vpop.f32.mrb[0].mxu0
    %v1879 = vadd.f32 %v1540, %v1878
    %1880 = vdwg.mxu0
    %1881 = vmatprep.subr.mxu0 %v1365
    %1882 = vmatpush1.msra.mxu0 %v1364
    %1883 = vmatprep.subr.mxu0 %v1373
    %1884 = vmatpush1.msra.mxu0 %v1372
    %1885 = vmatprep.subr.mxu0 %v1381
    %1886 = vmatpush1.msra.mxu0 %v1380
    %1887 = vmatprep.subr.mxu0 %v1389
    %1888 = vmatpush1.msra.mxu0 %v1388
    %1889 = vmatprep.subr.mxu0 %v1397
    %1890 = vmatpush1.msra.mxu0 %v1396
    %1891 = vmatprep.subr.mxu0 %v1405
    %1892 = vmatpush1.msra.mxu0 %v1404
    %1893 = vmatprep.subr.mxu0 %v1413
    %1894 = vmatpush1.msra.mxu0 %v1412
    %1895 = vmatprep.subr.mxu0 %v1421
    %1896 = vmatpush1.msra.mxu0 %v1420
    %1897 = vmatprep.subr.mxu0 %v1429
    %1898 = vmatpush1.msra.mxu0 %v1428
    %1899 = vmatprep.subr.mxu0 %v1437
    %1900 = vmatpush1.msra.mxu0 %v1436
    %1901 = vmatprep.subr.mxu0 %v1445
    %1902 = vmatpush1.msra.mxu0 %v1444
    %1903 = vmatprep.subr.mxu0 %v1453
    %1904 = vmatpush1.msra.mxu0 %v1452
    %1905 = vmatprep.subr.mxu0 %v1461
    %1906 = vmatpush1.msra.mxu0 %v1460
    %1907 = vmatprep.subr.mxu0 %v1469
    %1908 = vmatpush1.msra.mxu0 %v1468
    %1909 = vmatprep.subr.mxu0 %v1477
    %1910 = vmatpush1.msra.mxu0 %v1476
    %1911 = vmatprep.subr.mxu0 %v1485
    %1912 = vmatpush1.msra.mxu0 %v1484
    %1913 = vmatprep.subr.mxu0 0.0
    %1914 = vmatpush1.msra.mxu0 0.0
    %1915 = vmatprep.subr.mxu0 0.0
    %1916 = vmatpush1.msra.mxu0 0.0
    %1917 = vmatprep.subr.mxu0 0.0
    %1918 = vmatpush1.msra.mxu0 0.0
    %1919 = vmatprep.subr.mxu0 0.0
    %1920 = vmatpush1.msra.mxu0 0.0
    %1921 = vmatprep.subr.mxu0 0.0
    %1922 = vmatpush1.msra.mxu0 0.0
    %1923 = vmatprep.subr.mxu0 0.0
    %1924 = vmatpush1.msra.mxu0 0.0
    %1925 = vmatprep.subr.mxu0 0.0
    %1926 = vmatpush1.msra.mxu0 0.0
    %1927 = vmatprep.subr.mxu0 0.0
    %1928 = vmatpush1.msra.mxu0 0.0
    %1929 = vmatprep.subr.mxu0 0.0
    %1930 = vmatpush1.msra.mxu0 0.0
    %1931 = vmatprep.subr.mxu0 0.0
    %1932 = vmatpush1.msra.mxu0 0.0
    %1933 = vmatprep.subr.mxu0 0.0
    %1934 = vmatpush1.msra.mxu0 0.0
    %1935 = vmatprep.subr.mxu0 0.0
    %1936 = vmatpush1.msra.mxu0 0.0
    %1937 = vmatprep.subr.mxu0 0.0
    %1938 = vmatpush1.msra.mxu0 0.0
    %1939 = vmatprep.subr.mxu0 0.0
    %1940 = vmatpush1.msra.mxu0 0.0
    %1941 = vmatprep.subr.mxu0 0.0
    %1942 = vmatpush1.msra.mxu0 0.0
    %1943 = vmatprep.subr.mxu0 0.0
    %1944 = vmatpush1.msra.mxu0 0.0
    %1945 = vmatprep.mubr.f32.mxu0 0.0
    %1946 = vmatmul.mubr.f32.gmra.mrb[0].mxu0 %v1486
    %v1947 = vpop.f32.mrb[0].mxu0
    %v1948 = vadd.f32 %v1505, %v1947
    %v1949 = vpop.f32.mrb[0].mxu0
    %v1950 = vadd.f32 %v1505, %v1949
    %1951 = vmatprep.mubr.f32.mxu0 0.0
    %1952 = vmatmul.mubr.f32.gmra.mrb[0].mxu0 %v1487
    %v1953 = vpop.f32.mrb[0].mxu0
    %v1954 = vadd.f32 %v1510, %v1953
    %v1955 = vpop.f32.mrb[0].mxu0
    %v1956 = vadd.f32 %v1510, %v1955
    %1957 = vmatprep.mubr.f32.mxu0 0.0
    %1958 = vmatmul.mubr.f32.gmra.mrb[0].mxu0 %v1488
    %v1959 = vpop.f32.mrb[0].mxu0
    %v1960 = vadd.f32 %v1515, %v1959
    %v1961 = vpop.f32.mrb[0].mxu0
    %v1962 = vadd.f32 %v1515, %v1961
    %1963 = vmatprep.mubr.f32.mxu0 0.0
    %1964 = vmatmul.mubr.f32.gmra.mrb[0].mxu0 %v1489
    %v1965 = vpop.f32.mrb[0].mxu0
    %v1966 = vadd.f32 %v1520, %v1965
    %v1967 = vpop.f32.mrb[0].mxu0
    %v1968 = vadd.f32 %v1520, %v1967
    %1969 = vmatprep.mubr.f32.mxu0 0.0
    %1970 = vmatmul.mubr.f32.gmra.mrb[0].mxu0 %v1490
    %v1971 = vpop.f32.mrb[0].mxu0
    %v1972 = vadd.f32 %v1525, %v1971
    %v1973 = vpop.f32.mrb[0].mxu0
    %v1974 = vadd.f32 %v1525, %v1973
    %1975 = vmatprep.mubr.f32.mxu0 0.0
    %1976 = vmatmul.mubr.f32.gmra.mrb[0].mxu0 %v1491
    %v1977 = vpop.f32.mrb[0].mxu0
    %v1978 = vadd.f32 %v1530, %v1977
    %v1979 = vpop.f32.mrb[0].mxu0
    %v1980 = vadd.f32 %v1530, %v1979
    %1981 = vmatprep.mubr.f32.mxu0 0.0
    %1982 = vmatmul.mubr.f32.gmra.mrb[0].mxu0 %v1492
    %v1983 = vpop.f32.mrb[0].mxu0
    %v1984 = vadd.f32 %v1535, %v1983
    %v1985 = vpop.f32.mrb[0].mxu0
    %v1986 = vadd.f32 %v1535, %v1985
    %1987 = vmatprep.mubr.f32.mxu0 0.0
    %1988 = vmatmul.mubr.f32.gmra.mrb[0].mxu0 %v1493
    %v1989 = vpop.f32.mrb[0].mxu0
    %v1990 = vadd.f32 %v1540, %v1989
    %v1991 = vpop.f32.mrb[0].mxu0
    %v1992 = vadd.f32 %v1540, %v1991
    %1993 = vdwg.mxu0
    %v1994 = vmax.f32 %v1609, 0.0
    %v1995 = vmax.f32 %v1611, 0.0
    %v1996 = vmax.f32 %v1722, 0.0
    %v1997 = vmax.f32 %v1724, 0.0
    %v1998 = vmax.f32 %v1835, 0.0
    %v1999 = vmax.f32 %v1837, 0.0
    %v2000 = vmax.f32 %v1948, 0.0
    %v2001 = vmax.f32 %v1950, 0.0
    %v2002 = vmax.f32 %v1615, 0.0
    %v2003 = vmax.f32 %v1617, 0.0
    %v2004 = vmax.f32 %v1728, 0.0
    %v2005 = vmax.f32 %v1730, 0.0
    %v2006 = vmax.f32 %v1841, 0.0
    %v2007 = vmax.f32 %v1843, 0.0
    %v2008 = vmax.f32 %v1954, 0.0
    %v2009 = vmax.f32 %v1956, 0.0
    %v2010 = vmax.f32 %v1621, 0.0
    %v2011 = vmax.f32 %v1623, 0.0
    %v2012 = vmax.f32 %v1734, 0.0
    %v2013 = vmax.f32 %v1736, 0.0
    %v2014 = vmax.f32 %v1847, 0.0
    %v2015 = vmax.f32 %v1849, 0.0
    %v2016 = vmax.f32 %v1960, 0.0
    %v2017 = vmax.f32 %v1962, 0.0
    %v2018 = vmax.f32 %v1627, 0.0
    %v2019 = vmax.f32 %v1629, 0.0
    %v2020 = vmax.f32 %v1740, 0.0
    %v2021 = vmax.f32 %v1742, 0.0
    %v2022 = vmax.f32 %v1853, 0.0
    %v2023 = vmax.f32 %v1855, 0.0
    %v2024 = vmax.f32 %v1966, 0.0
    %v2025 = vmax.f32 %v1968, 0.0
    %v2026 = vmax.f32 %v1633, 0.0
    %v2027 = vmax.f32 %v1635, 0.0
    %v2028 = vmax.f32 %v1746, 0.0
    %v2029 = vmax.f32 %v1748, 0.0
    %v2030 = vmax.f32 %v1859, 0.0
    %v2031 = vmax.f32 %v1861, 0.0
    %v2032 = vmax.f32 %v1972, 0.0
    %v2033 = vmax.f32 %v1974, 0.0
    %v2034 = vmax.f32 %v1639, 0.0
    %v2035 = vmax.f32 %v1641, 0.0
    %v2036 = vmax.f32 %v1752, 0.0
    %v2037 = vmax.f32 %v1754, 0.0
    %v2038 = vmax.f32 %v1865, 0.0
    %v2039 = vmax.f32 %v1867, 0.0
    %v2040 = vmax.f32 %v1978, 0.0
    %v2041 = vmax.f32 %v1980, 0.0
    %v2042 = vmax.f32 %v1645, 0.0
    %v2043 = vmax.f32 %v1647, 0.0
    %v2044 = vmax.f32 %v1758, 0.0
    %v2045 = vmax.f32 %v1760, 0.0
    %v2046 = vmax.f32 %v1871, 0.0
    %v2047 = vmax.f32 %v1873, 0.0
    %v2048 = vmax.f32 %v1984, 0.0
    %v2049 = vmax.f32 %v1986, 0.0
    %v2050 = vmax.f32 %v1651, 0.0
    %v2051 = vmax.f32 %v1653, 0.0
    %v2052 = vmax.f32 %v1764, 0.0
    %v2053 = vmax.f32 %v1766, 0.0
    %v2054 = vmax.f32 %v1877, 0.0
    %v2055 = vmax.f32 %v1879, 0.0
    %v2056 = vmax.f32 %v1990, 0.0
    %v2057 = vmax.f32 %v1992, 0.0
    %v2058 = vld [vmem:[%s5] sm:$0xff]
    %v2059 = vld [vmem:[%s5 + $0x8] sm:$0xff]
    %v2060 = vld [vmem:[%s5 + $0x10] sm:$0xff]
    %v2061 = vld [vmem:[%s5 + $0x18] sm:$0xff]
    %v2062 = vld [vmem:[%s6] sm:$0xff]
    %v2063 = vld [vmem:[%s6 + $0x8] sm:$0xff]
    %v2064 = vld [vmem:[%s6 + $0x10] sm:$0xff]
    %v2065 = vld [vmem:[%s6 + $0x18] sm:$0xff]
    %2067 = vset.pattern.permute.xlu0 0
    %2068 = vperm.xlu0 %2067, %v2062
    %v2069 = vpop.permute.xlu0 %2068
    %2072 = vset.pattern.permute.xlu0 0
    %2073 = vperm.xlu0 %2072, %v2063
    %v2074 = vpop.permute.xlu0 %2073
    %2077 = vset.pattern.permute.xlu0 0
    %2078 = vperm.xlu0 %2077, %v2064
    %v2079 = vpop.permute.xlu0 %2078
    %2082 = vset.pattern.permute.xlu0 0
    %2083 = vperm.xlu0 %2082, %v2065
    %v2084 = vpop.permute.xlu0 %2083
    %vm2086 = vcmask 523264
    %v2088 = vsel %vm2086, %v2058, 0
    %v2091 = vsel %vm2086, %v2059, 0
    %v2094 = vsel %vm2086, %v2060, 0
    %v2097 = vsel %vm2086, %v2061, 0
    %2099 = vmatprep.subr.mxu0 %v1995
    %2100 = vmatpush1.msra.mxu0 %v1994
    %2101 = vmatprep.subr.mxu0 %v2003
    %2102 = vmatpush1.msra.mxu0 %v2002
    %2103 = vmatprep.subr.mxu0 %v2011
    %2104 = vmatpush1.msra.mxu0 %v2010
    %2105 = vmatprep.subr.mxu0 %v2019
    %2106 = vmatpush1.msra.mxu0 %v2018
    %2107 = vmatprep.subr.mxu0 %v2027
    %2108 = vmatpush1.msra.mxu0 %v2026
    %2109 = vmatprep.subr.mxu0 %v2035
    %2110 = vmatpush1.msra.mxu0 %v2034
    %2111 = vmatprep.subr.mxu0 %v2043
    %2112 = vmatpush1.msra.mxu0 %v2042
    %2113 = vmatprep.subr.mxu0 %v2051
    %2114 = vmatpush1.msra.mxu0 %v2050
    %2115 = vmatprep.subr.mxu0 0.0
    %2116 = vmatpush1.msra.mxu0 0.0
    %2117 = vmatprep.subr.mxu0 0.0
    %2118 = vmatpush1.msra.mxu0 0.0
    %2119 = vmatprep.subr.mxu0 0.0
    %2120 = vmatpush1.msra.mxu0 0.0
    %2121 = vmatprep.subr.mxu0 0.0
    %2122 = vmatpush1.msra.mxu0 0.0
    %2123 = vmatprep.subr.mxu0 0.0
    %2124 = vmatpush1.msra.mxu0 0.0
    %2125 = vmatprep.subr.mxu0 0.0
    %2126 = vmatpush1.msra.mxu0 0.0
    %2127 = vmatprep.subr.mxu0 0.0
    %2128 = vmatpush1.msra.mxu0 0.0
    %2129 = vmatprep.subr.mxu0 0.0
    %2130 = vmatpush1.msra.mxu0 0.0
    %2131 = vmatprep.subr.mxu0 0.0
    %2132 = vmatpush1.msra.mxu0 0.0
    %2133 = vmatprep.subr.mxu0 0.0
    %2134 = vmatpush1.msra.mxu0 0.0
    %2135 = vmatprep.subr.mxu0 0.0
    %2136 = vmatpush1.msra.mxu0 0.0
    %2137 = vmatprep.subr.mxu0 0.0
    %2138 = vmatpush1.msra.mxu0 0.0
    %2139 = vmatprep.subr.mxu0 0.0
    %2140 = vmatpush1.msra.mxu0 0.0
    %2141 = vmatprep.subr.mxu0 0.0
    %2142 = vmatpush1.msra.mxu0 0.0
    %2143 = vmatprep.subr.mxu0 0.0
    %2144 = vmatpush1.msra.mxu0 0.0
    %2145 = vmatprep.subr.mxu0 0.0
    %2146 = vmatpush1.msra.mxu0 0.0
    %2147 = vmatprep.subr.mxu0 0.0
    %2148 = vmatpush1.msra.mxu0 0.0
    %2149 = vmatprep.subr.mxu0 0.0
    %2150 = vmatpush1.msra.mxu0 0.0
    %2151 = vmatprep.subr.mxu0 0.0
    %2152 = vmatpush1.msra.mxu0 0.0
    %2153 = vmatprep.subr.mxu0 0.0
    %2154 = vmatpush1.msra.mxu0 0.0
    %2155 = vmatprep.subr.mxu0 0.0
    %2156 = vmatpush1.msra.mxu0 0.0
    %2157 = vmatprep.subr.mxu0 0.0
    %2158 = vmatpush1.msra.mxu0 0.0
    %2159 = vmatprep.subr.mxu0 0.0
    %2160 = vmatpush1.msra.mxu0 0.0
    %2161 = vmatprep.subr.mxu0 0.0
    %2162 = vmatpush1.msra.mxu0 0.0
    %2163 = vmatprep.mubr.f32.mxu0 0.0
    %2164 = vmatmul.mubr.f32.gmra.mrb[0].mxu0 %v2088
    %v2165 = vpop.f32.mrb[0].mxu0
    %v2166 = vadd.f32 %v2069, %v2165
    %v2167 = vpop.f32.mrb[0].mxu0
    %v2168 = vadd.f32 %v2069, %v2167
    %2169 = vmatprep.mubr.f32.mxu0 0.0
    %2170 = vmatmul.mubr.f32.gmra.mrb[0].mxu0 %v2091
    %v2171 = vpop.f32.mrb[0].mxu0
    %v2172 = vadd.f32 %v2074, %v2171
    %v2173 = vpop.f32.mrb[0].mxu0
    %v2174 = vadd.f32 %v2074, %v2173
    %2175 = vmatprep.mubr.f32.mxu0 0.0
    %2176 = vmatmul.mubr.f32.gmra.mrb[0].mxu0 %v2094
    %v2177 = vpop.f32.mrb[0].mxu0
    %v2178 = vadd.f32 %v2079, %v2177
    %v2179 = vpop.f32.mrb[0].mxu0
    %v2180 = vadd.f32 %v2079, %v2179
    %2181 = vmatprep.mubr.f32.mxu0 0.0
    %2182 = vmatmul.mubr.f32.gmra.mrb[0].mxu0 %v2097
    %v2183 = vpop.f32.mrb[0].mxu0
    %v2184 = vadd.f32 %v2084, %v2183
    %v2185 = vpop.f32.mrb[0].mxu0
    %v2186 = vadd.f32 %v2084, %v2185
    %2187 = vdwg.mxu0
    %2188 = vmatprep.subr.mxu0 %v1997
    %2189 = vmatpush1.msra.mxu0 %v1996
    %2190 = vmatprep.subr.mxu0 %v2005
    %2191 = vmatpush1.msra.mxu0 %v2004
    %2192 = vmatprep.subr.mxu0 %v2013
    %2193 = vmatpush1.msra.mxu0 %v2012
    %2194 = vmatprep.subr.mxu0 %v2021
    %2195 = vmatpush1.msra.mxu0 %v2020
    %2196 = vmatprep.subr.mxu0 %v2029
    %2197 = vmatpush1.msra.mxu0 %v2028
    %2198 = vmatprep.subr.mxu0 %v2037
    %2199 = vmatpush1.msra.mxu0 %v2036
    %2200 = vmatprep.subr.mxu0 %v2045
    %2201 = vmatpush1.msra.mxu0 %v2044
    %2202 = vmatprep.subr.mxu0 %v2053
    %2203 = vmatpush1.msra.mxu0 %v2052
    %2204 = vmatprep.subr.mxu0 0.0
    %2205 = vmatpush1.msra.mxu0 0.0
    %2206 = vmatprep.subr.mxu0 0.0
    %2207 = vmatpush1.msra.mxu0 0.0
    %2208 = vmatprep.subr.mxu0 0.0
    %2209 = vmatpush1.msra.mxu0 0.0
    %2210 = vmatprep.subr.mxu0 0.0
    %2211 = vmatpush1.msra.mxu0 0.0
    %2212 = vmatprep.subr.mxu0 0.0
    %2213 = vmatpush1.msra.mxu0 0.0
    %2214 = vmatprep.subr.mxu0 0.0
    %2215 = vmatpush1.msra.mxu0 0.0
    %2216 = vmatprep.subr.mxu0 0.0
    %2217 = vmatpush1.msra.mxu0 0.0
    %2218 = vmatprep.subr.mxu0 0.0
    %2219 = vmatpush1.msra.mxu0 0.0
    %2220 = vmatprep.subr.mxu0 0.0
    %2221 = vmatpush1.msra.mxu0 0.0
    %2222 = vmatprep.subr.mxu0 0.0
    %2223 = vmatpush1.msra.mxu0 0.0
    %2224 = vmatprep.subr.mxu0 0.0
    %2225 = vmatpush1.msra.mxu0 0.0
    %2226 = vmatprep.subr.mxu0 0.0
    %2227 = vmatpush1.msra.mxu0 0.0
    %2228 = vmatprep.subr.mxu0 0.0
    %2229 = vmatpush1.msra.mxu0 0.0
    %2230 = vmatprep.subr.mxu0 0.0
    %2231 = vmatpush1.msra.mxu0 0.0
    %2232 = vmatprep.subr.mxu0 0.0
    %2233 = vmatpush1.msra.mxu0 0.0
    %2234 = vmatprep.subr.mxu0 0.0
    %2235 = vmatpush1.msra.mxu0 0.0
    %2236 = vmatprep.subr.mxu0 0.0
    %2237 = vmatpush1.msra.mxu0 0.0
    %2238 = vmatprep.subr.mxu0 0.0
    %2239 = vmatpush1.msra.mxu0 0.0
    %2240 = vmatprep.subr.mxu0 0.0
    %2241 = vmatpush1.msra.mxu0 0.0
    %2242 = vmatprep.subr.mxu0 0.0
    %2243 = vmatpush1.msra.mxu0 0.0
    %2244 = vmatprep.subr.mxu0 0.0
    %2245 = vmatpush1.msra.mxu0 0.0
    %2246 = vmatprep.subr.mxu0 0.0
    %2247 = vmatpush1.msra.mxu0 0.0
    %2248 = vmatprep.subr.mxu0 0.0
    %2249 = vmatpush1.msra.mxu0 0.0
    %2250 = vmatprep.subr.mxu0 0.0
    %2251 = vmatpush1.msra.mxu0 0.0
    %2252 = vmatprep.mubr.f32.mxu0 0.0
    %2253 = vmatmul.mubr.f32.gmra.mrb[0].mxu0 %v2088
    %v2254 = vpop.f32.mrb[0].mxu0
    %v2255 = vadd.f32 %v2069, %v2254
    %v2256 = vpop.f32.mrb[0].mxu0
    %v2257 = vadd.f32 %v2069, %v2256
    %2258 = vmatprep.mubr.f32.mxu0 0.0
    %2259 = vmatmul.mubr.f32.gmra.mrb[0].mxu0 %v2091
    %v2260 = vpop.f32.mrb[0].mxu0
    %v2261 = vadd.f32 %v2074, %v2260
    %v2262 = vpop.f32.mrb[0].mxu0
    %v2263 = vadd.f32 %v2074, %v2262
    %2264 = vmatprep.mubr.f32.mxu0 0.0
    %2265 = vmatmul.mubr.f32.gmra.mrb[0].mxu0 %v2094
    %v2266 = vpop.f32.mrb[0].mxu0
    %v2267 = vadd.f32 %v2079, %v2266
    %v2268 = vpop.f32.mrb[0].mxu0
    %v2269 = vadd.f32 %v2079, %v2268
    %2270 = vmatprep.mubr.f32.mxu0 0.0
    %2271 = vmatmul.mubr.f32.gmra.mrb[0].mxu0 %v2097
    %v2272 = vpop.f32.mrb[0].mxu0
    %v2273 = vadd.f32 %v2084, %v2272
    %v2274 = vpop.f32.mrb[0].mxu0
    %v2275 = vadd.f32 %v2084, %v2274
    %2276 = vdwg.mxu0
    %2277 = vmatprep.subr.mxu0 %v1999
    %2278 = vmatpush1.msra.mxu0 %v1998
    %2279 = vmatprep.subr.mxu0 %v2007
    %2280 = vmatpush1.msra.mxu0 %v2006
    %2281 = vmatprep.subr.mxu0 %v2015
    %2282 = vmatpush1.msra.mxu0 %v2014
    %2283 = vmatprep.subr.mxu0 %v2023
    %2284 = vmatpush1.msra.mxu0 %v2022
    %2285 = vmatprep.subr.mxu0 %v2031
    %2286 = vmatpush1.msra.mxu0 %v2030
    %2287 = vmatprep.subr.mxu0 %v2039
    %2288 = vmatpush1.msra.mxu0 %v2038
    %2289 = vmatprep.subr.mxu0 %v2047
    %2290 = vmatpush1.msra.mxu0 %v2046
    %2291 = vmatprep.subr.mxu0 %v2055
    %2292 = vmatpush1.msra.mxu0 %v2054
    %2293 = vmatprep.subr.mxu0 0.0
    %2294 = vmatpush1.msra.mxu0 0.0
    %2295 = vmatprep.subr.mxu0 0.0
    %2296 = vmatpush1.msra.mxu0 0.0
    %2297 = vmatprep.subr.mxu0 0.0
    %2298 = vmatpush1.msra.mxu0 0.0
    %2299 = vmatprep.subr.mxu0 0.0
    %2300 = vmatpush1.msra.mxu0 0.0
    %2301 = vmatprep.subr.mxu0 0.0
    %2302 = vmatpush1.msra.mxu0 0.0
    %2303 = vmatprep.subr.mxu0 0.0
    %2304 = vmatpush1.msra.mxu0 0.0
    %2305 = vmatprep.subr.mxu0 0.0
    %2306 = vmatpush1.msra.mxu0 0.0
    %2307 = vmatprep.subr.mxu0 0.0
    %2308 = vmatpush1.msra.mxu0 0.0
    %2309 = vmatprep.subr.mxu0 0.0
    %2310 = vmatpush1.msra.mxu0 0.0
    %2311 = vmatprep.subr.mxu0 0.0
    %2312 = vmatpush1.msra.mxu0 0.0
    %2313 = vmatprep.subr.mxu0 0.0
    %2314 = vmatpush1.msra.mxu0 0.0
    %2315 = vmatprep.subr.mxu0 0.0
    %2316 = vmatpush1.msra.mxu0 0.0
    %2317 = vmatprep.subr.mxu0 0.0
    %2318 = vmatpush1.msra.mxu0 0.0
    %2319 = vmatprep.subr.mxu0 0.0
    %2320 = vmatpush1.msra.mxu0 0.0
    %2321 = vmatprep.subr.mxu0 0.0
    %2322 = vmatpush1.msra.mxu0 0.0
    %2323 = vmatprep.subr.mxu0 0.0
    %2324 = vmatpush1.msra.mxu0 0.0
    %2325 = vmatprep.subr.mxu0 0.0
    %2326 = vmatpush1.msra.mxu0 0.0
    %2327 = vmatprep.subr.mxu0 0.0
    %2328 = vmatpush1.msra.mxu0 0.0
    %2329 = vmatprep.subr.mxu0 0.0
    %2330 = vmatpush1.msra.mxu0 0.0
    %2331 = vmatprep.subr.mxu0 0.0
    %2332 = vmatpush1.msra.mxu0 0.0
    %2333 = vmatprep.subr.mxu0 0.0
    %2334 = vmatpush1.msra.mxu0 0.0
    %2335 = vmatprep.subr.mxu0 0.0
    %2336 = vmatpush1.msra.mxu0 0.0
    %2337 = vmatprep.subr.mxu0 0.0
    %2338 = vmatpush1.msra.mxu0 0.0
    %2339 = vmatprep.subr.mxu0 0.0
    %2340 = vmatpush1.msra.mxu0 0.0
    %2341 = vmatprep.mubr.f32.mxu0 0.0
    %2342 = vmatmul.mubr.f32.gmra.mrb[0].mxu0 %v2088
    %v2343 = vpop.f32.mrb[0].mxu0
    %v2344 = vadd.f32 %v2069, %v2343
    %v2345 = vpop.f32.mrb[0].mxu0
    %v2346 = vadd.f32 %v2069, %v2345
    %2347 = vmatprep.mubr.f32.mxu0 0.0
    %2348 = vmatmul.mubr.f32.gmra.mrb[0].mxu0 %v2091
    %v2349 = vpop.f32.mrb[0].mxu0
    %v2350 = vadd.f32 %v2074, %v2349
    %v2351 = vpop.f32.mrb[0].mxu0
    %v2352 = vadd.f32 %v2074, %v2351
    %2353 = vmatprep.mubr.f32.mxu0 0.0
    %2354 = vmatmul.mubr.f32.gmra.mrb[0].mxu0 %v2094
    %v2355 = vpop.f32.mrb[0].mxu0
    %v2356 = vadd.f32 %v2079, %v2355
    %v2357 = vpop.f32.mrb[0].mxu0
    %v2358 = vadd.f32 %v2079, %v2357
    %2359 = vmatprep.mubr.f32.mxu0 0.0
    %2360 = vmatmul.mubr.f32.gmra.mrb[0].mxu0 %v2097
    %v2361 = vpop.f32.mrb[0].mxu0
    %v2362 = vadd.f32 %v2084, %v2361
    %v2363 = vpop.f32.mrb[0].mxu0
    %v2364 = vadd.f32 %v2084, %v2363
    %2365 = vdwg.mxu0
    %2366 = vmatprep.subr.mxu0 %v2001
    %2367 = vmatpush1.msra.mxu0 %v2000
    %2368 = vmatprep.subr.mxu0 %v2009
    %2369 = vmatpush1.msra.mxu0 %v2008
    %2370 = vmatprep.subr.mxu0 %v2017
    %2371 = vmatpush1.msra.mxu0 %v2016
    %2372 = vmatprep.subr.mxu0 %v2025
    %2373 = vmatpush1.msra.mxu0 %v2024
    %2374 = vmatprep.subr.mxu0 %v2033
    %2375 = vmatpush1.msra.mxu0 %v2032
    %2376 = vmatprep.subr.mxu0 %v2041
    %2377 = vmatpush1.msra.mxu0 %v2040
    %2378 = vmatprep.subr.mxu0 %v2049
    %2379 = vmatpush1.msra.mxu0 %v2048
    %2380 = vmatprep.subr.mxu0 %v2057
    %2381 = vmatpush1.msra.mxu0 %v2056
    %2382 = vmatprep.subr.mxu0 0.0
    %2383 = vmatpush1.msra.mxu0 0.0
    %2384 = vmatprep.subr.mxu0 0.0
    %2385 = vmatpush1.msra.mxu0 0.0
    %2386 = vmatprep.subr.mxu0 0.0
    %2387 = vmatpush1.msra.mxu0 0.0
    %2388 = vmatprep.subr.mxu0 0.0
    %2389 = vmatpush1.msra.mxu0 0.0
    %2390 = vmatprep.subr.mxu0 0.0
    %2391 = vmatpush1.msra.mxu0 0.0
    %2392 = vmatprep.subr.mxu0 0.0
    %2393 = vmatpush1.msra.mxu0 0.0
    %2394 = vmatprep.subr.mxu0 0.0
    %2395 = vmatpush1.msra.mxu0 0.0
    %2396 = vmatprep.subr.mxu0 0.0
    %2397 = vmatpush1.msra.mxu0 0.0
    %2398 = vmatprep.subr.mxu0 0.0
    %2399 = vmatpush1.msra.mxu0 0.0
    %2400 = vmatprep.subr.mxu0 0.0
    %2401 = vmatpush1.msra.mxu0 0.0
    %2402 = vmatprep.subr.mxu0 0.0
    %2403 = vmatpush1.msra.mxu0 0.0
    %2404 = vmatprep.subr.mxu0 0.0
    %2405 = vmatpush1.msra.mxu0 0.0
    %2406 = vmatprep.subr.mxu0 0.0
    %2407 = vmatpush1.msra.mxu0 0.0
    %2408 = vmatprep.subr.mxu0 0.0
    %2409 = vmatpush1.msra.mxu0 0.0
    %2410 = vmatprep.subr.mxu0 0.0
    %2411 = vmatpush1.msra.mxu0 0.0
    %2412 = vmatprep.subr.mxu0 0.0
    %2413 = vmatpush1.msra.mxu0 0.0
    %2414 = vmatprep.subr.mxu0 0.0
    %2415 = vmatpush1.msra.mxu0 0.0
    %2416 = vmatprep.subr.mxu0 0.0
    %2417 = vmatpush1.msra.mxu0 0.0
    %2418 = vmatprep.subr.mxu0 0.0
    %2419 = vmatpush1.msra.mxu0 0.0
    %2420 = vmatprep.subr.mxu0 0.0
    %2421 = vmatpush1.msra.mxu0 0.0
    %2422 = vmatprep.subr.mxu0 0.0
    %2423 = vmatpush1.msra.mxu0 0.0
    %2424 = vmatprep.subr.mxu0 0.0
    %2425 = vmatpush1.msra.mxu0 0.0
    %2426 = vmatprep.subr.mxu0 0.0
    %2427 = vmatpush1.msra.mxu0 0.0
    %2428 = vmatprep.subr.mxu0 0.0
    %2429 = vmatpush1.msra.mxu0 0.0
    %2430 = vmatprep.mubr.f32.mxu0 0.0
    %2431 = vmatmul.mubr.f32.gmra.mrb[0].mxu0 %v2088
    %v2432 = vpop.f32.mrb[0].mxu0
    %v2433 = vadd.f32 %v2069, %v2432
    %v2434 = vpop.f32.mrb[0].mxu0
    %v2435 = vadd.f32 %v2069, %v2434
    %2436 = vmatprep.mubr.f32.mxu0 0.0
    %2437 = vmatmul.mubr.f32.gmra.mrb[0].mxu0 %v2091
    %v2438 = vpop.f32.mrb[0].mxu0
    %v2439 = vadd.f32 %v2074, %v2438
    %v2440 = vpop.f32.mrb[0].mxu0
    %v2441 = vadd.f32 %v2074, %v2440
    %2442 = vmatprep.mubr.f32.mxu0 0.0
    %2443 = vmatmul.mubr.f32.gmra.mrb[0].mxu0 %v2094
    %v2444 = vpop.f32.mrb[0].mxu0
    %v2445 = vadd.f32 %v2079, %v2444
    %v2446 = vpop.f32.mrb[0].mxu0
    %v2447 = vadd.f32 %v2079, %v2446
    %2448 = vmatprep.mubr.f32.mxu0 0.0
    %2449 = vmatmul.mubr.f32.gmra.mrb[0].mxu0 %v2097
    %v2450 = vpop.f32.mrb[0].mxu0
    %v2451 = vadd.f32 %v2084, %v2450
    %v2452 = vpop.f32.mrb[0].mxu0
    %v2453 = vadd.f32 %v2084, %v2452
    %2454 = vdwg.mxu0
    %v2455 = vmax.f32 %v2166, 0.0
    %v2456 = vmax.f32 %v2168, 0.0
    %v2457 = vmax.f32 %v2255, 0.0
    %v2458 = vmax.f32 %v2257, 0.0
    %v2459 = vmax.f32 %v2344, 0.0
    %v2460 = vmax.f32 %v2346, 0.0
    %v2461 = vmax.f32 %v2433, 0.0
    %v2462 = vmax.f32 %v2435, 0.0
    %v2463 = vmax.f32 %v2172, 0.0
    %v2464 = vmax.f32 %v2174, 0.0
    %v2465 = vmax.f32 %v2261, 0.0
    %v2466 = vmax.f32 %v2263, 0.0
    %v2467 = vmax.f32 %v2350, 0.0
    %v2468 = vmax.f32 %v2352, 0.0
    %v2469 = vmax.f32 %v2439, 0.0
    %v2470 = vmax.f32 %v2441, 0.0
    %v2471 = vmax.f32 %v2178, 0.0
    %v2472 = vmax.f32 %v2180, 0.0
    %v2473 = vmax.f32 %v2267, 0.0
    %v2474 = vmax.f32 %v2269, 0.0
    %v2475 = vmax.f32 %v2356, 0.0
    %v2476 = vmax.f32 %v2358, 0.0
    %v2477 = vmax.f32 %v2445, 0.0
    %v2478 = vmax.f32 %v2447, 0.0
    %v2479 = vmax.f32 %v2184, 0.0
    %v2480 = vmax.f32 %v2186, 0.0
    %v2481 = vmax.f32 %v2273, 0.0
    %v2482 = vmax.f32 %v2275, 0.0
    %v2483 = vmax.f32 %v2362, 0.0
    %v2484 = vmax.f32 %v2364, 0.0
    %v2485 = vmax.f32 %v2451, 0.0
    %v2486 = vmax.f32 %v2453, 0.0
    %v2487 = vld [vmem:[%s7] sm:$0xff]
    %v2488 = vld [vmem:[%s7 + $0x8] sm:$0xff]
    %v2489 = vld [vmem:[%s8] sm:$0xff]
    %v2490 = vld [vmem:[%s8 + $0x8] sm:$0xff]
    %2492 = vset.pattern.permute.xlu0 0
    %2493 = vperm.xlu0 %2492, %v2489
    %v2494 = vpop.permute.xlu0 %2493
    %2497 = vset.pattern.permute.xlu0 0
    %2498 = vperm.xlu0 %2497, %v2490
    %v2499 = vpop.permute.xlu0 %2498
    %vm2501 = vcmask 261120
    %v2503 = vsel %vm2501, %v2487, 0
    %v2506 = vsel %vm2501, %v2488, 0
    %2508 = vmatprep.subr.mxu0 %v2456
    %2509 = vmatpush1.msra.mxu0 %v2455
    %2510 = vmatprep.subr.mxu0 %v2464
    %2511 = vmatpush1.msra.mxu0 %v2463
    %2512 = vmatprep.subr.mxu0 %v2472
    %2513 = vmatpush1.msra.mxu0 %v2471
    %2514 = vmatprep.subr.mxu0 %v2480
    %2515 = vmatpush1.msra.mxu0 %v2479
    %2516 = vmatprep.subr.mxu0 0.0
    %2517 = vmatpush1.msra.mxu0 0.0
    %2518 = vmatprep.subr.mxu0 0.0
    %2519 = vmatpush1.msra.mxu0 0.0
    %2520 = vmatprep.subr.mxu0 0.0
    %2521 = vmatpush1.msra.mxu0 0.0
    %2522 = vmatprep.subr.mxu0 0.0
    %2523 = vmatpush1.msra.mxu0 0.0
    %2524 = vmatprep.subr.mxu0 0.0
    %2525 = vmatpush1.msra.mxu0 0.0
    %2526 = vmatprep.subr.mxu0 0.0
    %2527 = vmatpush1.msra.mxu0 0.0
    %2528 = vmatprep.subr.mxu0 0.0
    %2529 = vmatpush1.msra.mxu0 0.0
    %2530 = vmatprep.subr.mxu0 0.0
    %2531 = vmatpush1.msra.mxu0 0.0
    %2532 = vmatprep.subr.mxu0 0.0
    %2533 = vmatpush1.msra.mxu0 0.0
    %2534 = vmatprep.subr.mxu0 0.0
    %2535 = vmatpush1.msra.mxu0 0.0
    %2536 = vmatprep.subr.mxu0 0.0
    %2537 = vmatpush1.msra.mxu0 0.0
    %2538 = vmatprep.subr.mxu0 0.0
    %2539 = vmatpush1.msra.mxu0 0.0
    %2540 = vmatprep.subr.mxu0 0.0
    %2541 = vmatpush1.msra.mxu0 0.0
    %2542 = vmatprep.subr.mxu0 0.0
    %2543 = vmatpush1.msra.mxu0 0.0
    %2544 = vmatprep.subr.mxu0 0.0
    %2545 = vmatpush1.msra.mxu0 0.0
    %2546 = vmatprep.subr.mxu0 0.0
    %2547 = vmatpush1.msra.mxu0 0.0
    %2548 = vmatprep.subr.mxu0 0.0
    %2549 = vmatpush1.msra.mxu0 0.0
    %2550 = vmatprep.subr.mxu0 0.0
    %2551 = vmatpush1.msra.mxu0 0.0
    %2552 = vmatprep.subr.mxu0 0.0
    %2553 = vmatpush1.msra.mxu0 0.0
    %2554 = vmatprep.subr.mxu0 0.0
    %2555 = vmatpush1.msra.mxu0 0.0
    %2556 = vmatprep.subr.mxu0 0.0
    %2557 = vmatpush1.msra.mxu0 0.0
    %2558 = vmatprep.subr.mxu0 0.0
    %2559 = vmatpush1.msra.mxu0 0.0
    %2560 = vmatprep.subr.mxu0 0.0
    %2561 = vmatpush1.msra.mxu0 0.0
    %2562 = vmatprep.subr.mxu0 0.0
    %2563 = vmatpush1.msra.mxu0 0.0
    %2564 = vmatprep.subr.mxu0 0.0
    %2565 = vmatpush1.msra.mxu0 0.0
    %2566 = vmatprep.subr.mxu0 0.0
    %2567 = vmatpush1.msra.mxu0 0.0
    %2568 = vmatprep.subr.mxu0 0.0
    %2569 = vmatpush1.msra.mxu0 0.0
    %2570 = vmatprep.subr.mxu0 0.0
    %2571 = vmatpush1.msra.mxu0 0.0
    %2572 = vmatprep.mubr.f32.mxu0 0.0
    %2573 = vmatmul.mubr.f32.gmra.mrb[0].mxu0 %v2503
    %v2574 = vpop.f32.mrb[0].mxu0
    %v2575 = vadd.f32 %v2494, %v2574
    %v2576 = vpop.f32.mrb[0].mxu0
    %v2577 = vadd.f32 %v2494, %v2576
    %2578 = vmatprep.mubr.f32.mxu0 0.0
    %2579 = vmatmul.mubr.f32.gmra.mrb[0].mxu0 %v2506
    %v2580 = vpop.f32.mrb[0].mxu0
    %v2581 = vadd.f32 %v2499, %v2580
    %v2582 = vpop.f32.mrb[0].mxu0
    %v2583 = vadd.f32 %v2499, %v2582
    %2584 = vdwg.mxu0
    %2585 = vmatprep.subr.mxu0 %v2458
    %2586 = vmatpush1.msra.mxu0 %v2457
    %2587 = vmatprep.subr.mxu0 %v2466
    %2588 = vmatpush1.msra.mxu0 %v2465
    %2589 = vmatprep.subr.mxu0 %v2474
    %2590 = vmatpush1.msra.mxu0 %v2473
    %2591 = vmatprep.subr.mxu0 %v2482
    %2592 = vmatpush1.msra.mxu0 %v2481
    %2593 = vmatprep.subr.mxu0 0.0
    %2594 = vmatpush1.msra.mxu0 0.0
    %2595 = vmatprep.subr.mxu0 0.0
    %2596 = vmatpush1.msra.mxu0 0.0
    %2597 = vmatprep.subr.mxu0 0.0
    %2598 = vmatpush1.msra.mxu0 0.0
    %2599 = vmatprep.subr.mxu0 0.0
    %2600 = vmatpush1.msra.mxu0 0.0
    %2601 = vmatprep.subr.mxu0 0.0
    %2602 = vmatpush1.msra.mxu0 0.0
    %2603 = vmatprep.subr.mxu0 0.0
    %2604 = vmatpush1.msra.mxu0 0.0
    %2605 = vmatprep.subr.mxu0 0.0
    %2606 = vmatpush1.msra.mxu0 0.0
    %2607 = vmatprep.subr.mxu0 0.0
    %2608 = vmatpush1.msra.mxu0 0.0
    %2609 = vmatprep.subr.mxu0 0.0
    %2610 = vmatpush1.msra.mxu0 0.0
    %2611 = vmatprep.subr.mxu0 0.0
    %2612 = vmatpush1.msra.mxu0 0.0
    %2613 = vmatprep.subr.mxu0 0.0
    %2614 = vmatpush1.msra.mxu0 0.0
    %2615 = vmatprep.subr.mxu0 0.0
    %2616 = vmatpush1.msra.mxu0 0.0
    %2617 = vmatprep.subr.mxu0 0.0
    %2618 = vmatpush1.msra.mxu0 0.0
    %2619 = vmatprep.subr.mxu0 0.0
    %2620 = vmatpush1.msra.mxu0 0.0
    %2621 = vmatprep.subr.mxu0 0.0
    %2622 = vmatpush1.msra.mxu0 0.0
    %2623 = vmatprep.subr.mxu0 0.0
    %2624 = vmatpush1.msra.mxu0 0.0
    %2625 = vmatprep.subr.mxu0 0.0
    %2626 = vmatpush1.msra.mxu0 0.0
    %2627 = vmatprep.subr.mxu0 0.0
    %2628 = vmatpush1.msra.mxu0 0.0
    %2629 = vmatprep.subr.mxu0 0.0
    %2630 = vmatpush1.msra.mxu0 0.0
    %2631 = vmatprep.subr.mxu0 0.0
    %2632 = vmatpush1.msra.mxu0 0.0
    %2633 = vmatprep.subr.mxu0 0.0
    %2634 = vmatpush1.msra.mxu0 0.0
    %2635 = vmatprep.subr.mxu0 0.0
    %2636 = vmatpush1.msra.mxu0 0.0
    %2637 = vmatprep.subr.mxu0 0.0
    %2638 = vmatpush1.msra.mxu0 0.0
    %2639 = vmatprep.subr.mxu0 0.0
    %2640 = vmatpush1.msra.mxu0 0.0
    %2641 = vmatprep.subr.mxu0 0.0
    %2642 = vmatpush1.msra.mxu0 0.0
    %2643 = vmatprep.subr.mxu0 0.0
    %2644 = vmatpush1.msra.mxu0 0.0
    %2645 = vmatprep.subr.mxu0 0.0
    %2646 = vmatpush1.msra.mxu0 0.0
    %2647 = vmatprep.subr.mxu0 0.0
    %2648 = vmatpush1.msra.mxu0 0.0
    %2649 = vmatprep.mubr.f32.mxu0 0.0
    %2650 = vmatmul.mubr.f32.gmra.mrb[0].mxu0 %v2503
    %v2651 = vpop.f32.mrb[0].mxu0
    %v2652 = vadd.f32 %v2494, %v2651
    %v2653 = vpop.f32.mrb[0].mxu0
    %v2654 = vadd.f32 %v2494, %v2653
    %2655 = vmatprep.mubr.f32.mxu0 0.0
    %2656 = vmatmul.mubr.f32.gmra.mrb[0].mxu0 %v2506
    %v2657 = vpop.f32.mrb[0].mxu0
    %v2658 = vadd.f32 %v2499, %v2657
    %v2659 = vpop.f32.mrb[0].mxu0
    %v2660 = vadd.f32 %v2499, %v2659
    %2661 = vdwg.mxu0
    %2662 = vmatprep.subr.mxu0 %v2460
    %2663 = vmatpush1.msra.mxu0 %v2459
    %2664 = vmatprep.subr.mxu0 %v2468
    %2665 = vmatpush1.msra.mxu0 %v2467
    %2666 = vmatprep.subr.mxu0 %v2476
    %2667 = vmatpush1.msra.mxu0 %v2475
    %2668 = vmatprep.subr.mxu0 %v2484
    %2669 = vmatpush1.msra.mxu0 %v2483
    %2670 = vmatprep.subr.mxu0 0.0
    %2671 = vmatpush1.msra.mxu0 0.0
    %2672 = vmatprep.subr.mxu0 0.0
    %2673 = vmatpush1.msra.mxu0 0.0
    %2674 = vmatprep.subr.mxu0 0.0
    %2675 = vmatpush1.msra.mxu0 0.0
    %2676 = vmatprep.subr.mxu0 0.0
    %2677 = vmatpush1.msra.mxu0 0.0
    %2678 = vmatprep.subr.mxu0 0.0
    %2679 = vmatpush1.msra.mxu0 0.0
    %2680 = vmatprep.subr.mxu0 0.0
    %2681 = vmatpush1.msra.mxu0 0.0
    %2682 = vmatprep.subr.mxu0 0.0
    %2683 = vmatpush1.msra.mxu0 0.0
    %2684 = vmatprep.subr.mxu0 0.0
    %2685 = vmatpush1.msra.mxu0 0.0
    %2686 = vmatprep.subr.mxu0 0.0
    %2687 = vmatpush1.msra.mxu0 0.0
    %2688 = vmatprep.subr.mxu0 0.0
    %2689 = vmatpush1.msra.mxu0 0.0
    %2690 = vmatprep.subr.mxu0 0.0
    %2691 = vmatpush1.msra.mxu0 0.0
    %2692 = vmatprep.subr.mxu0 0.0
    %2693 = vmatpush1.msra.mxu0 0.0
    %2694 = vmatprep.subr.mxu0 0.0
    %2695 = vmatpush1.msra.mxu0 0.0
    %2696 = vmatprep.subr.mxu0 0.0
    %2697 = vmatpush1.msra.mxu0 0.0
    %2698 = vmatprep.subr.mxu0 0.0
    %2699 = vmatpush1.msra.mxu0 0.0
    %2700 = vmatprep.subr.mxu0 0.0
    %2701 = vmatpush1.msra.mxu0 0.0
    %2702 = vmatprep.subr.mxu0 0.0
    %2703 = vmatpush1.msra.mxu0 0.0
    %2704 = vmatprep.subr.mxu0 0.0
    %2705 = vmatpush1.msra.mxu0 0.0
    %2706 = vmatprep.subr.mxu0 0.0
    %2707 = vmatpush1.msra.mxu0 0.0
    %2708 = vmatprep.subr.mxu0 0.0
    %2709 = vmatpush1.msra.mxu0 0.0
    %2710 = vmatprep.subr.mxu0 0.0
    %2711 = vmatpush1.msra.mxu0 0.0
    %2712 = vmatprep.subr.mxu0 0.0
    %2713 = vmatpush1.msra.mxu0 0.0
    %2714 = vmatprep.subr.mxu0 0.0
    %2715 = vmatpush1.msra.mxu0 0.0
    %2716 = vmatprep.subr.mxu0 0.0
    %2717 = vmatpush1.msra.mxu0 0.0
    %2718 = vmatprep.subr.mxu0 0.0
    %2719 = vmatpush1.msra.mxu0 0.0
    %2720 = vmatprep.subr.mxu0 0.0
    %2721 = vmatpush1.msra.mxu0 0.0
    %2722 = vmatprep.subr.mxu0 0.0
    %2723 = vmatpush1.msra.mxu0 0.0
    %2724 = vmatprep.subr.mxu0 0.0
    %2725 = vmatpush1.msra.mxu0 0.0
    %2726 = vmatprep.mubr.f32.mxu0 0.0
    %2727 = vmatmul.mubr.f32.gmra.mrb[0].mxu0 %v2503
    %v2728 = vpop.f32.mrb[0].mxu0
    %v2729 = vadd.f32 %v2494, %v2728
    %v2730 = vpop.f32.mrb[0].mxu0
    %v2731 = vadd.f32 %v2494, %v2730
    %2732 = vmatprep.mubr.f32.mxu0 0.0
    %2733 = vmatmul.mubr.f32.gmra.mrb[0].mxu0 %v2506
    %v2734 = vpop.f32.mrb[0].mxu0
    %v2735 = vadd.f32 %v2499, %v2734
    %v2736 = vpop.f32.mrb[0].mxu0
    %v2737 = vadd.f32 %v2499, %v2736
    %2738 = vdwg.mxu0
    %2739 = vmatprep.subr.mxu0 %v2462
    %2740 = vmatpush1.msra.mxu0 %v2461
    %2741 = vmatprep.subr.mxu0 %v2470
    %2742 = vmatpush1.msra.mxu0 %v2469
    %2743 = vmatprep.subr.mxu0 %v2478
    %2744 = vmatpush1.msra.mxu0 %v2477
    %2745 = vmatprep.subr.mxu0 %v2486
    %2746 = vmatpush1.msra.mxu0 %v2485
    %2747 = vmatprep.subr.mxu0 0.0
    %2748 = vmatpush1.msra.mxu0 0.0
    %2749 = vmatprep.subr.mxu0 0.0
    %2750 = vmatpush1.msra.mxu0 0.0
    %2751 = vmatprep.subr.mxu0 0.0
    %2752 = vmatpush1.msra.mxu0 0.0
    %2753 = vmatprep.subr.mxu0 0.0
    %2754 = vmatpush1.msra.mxu0 0.0
    %2755 = vmatprep.subr.mxu0 0.0
    %2756 = vmatpush1.msra.mxu0 0.0
    %2757 = vmatprep.subr.mxu0 0.0
    %2758 = vmatpush1.msra.mxu0 0.0
    %2759 = vmatprep.subr.mxu0 0.0
    %2760 = vmatpush1.msra.mxu0 0.0
    %2761 = vmatprep.subr.mxu0 0.0
    %2762 = vmatpush1.msra.mxu0 0.0
    %2763 = vmatprep.subr.mxu0 0.0
    %2764 = vmatpush1.msra.mxu0 0.0
    %2765 = vmatprep.subr.mxu0 0.0
    %2766 = vmatpush1.msra.mxu0 0.0
    %2767 = vmatprep.subr.mxu0 0.0
    %2768 = vmatpush1.msra.mxu0 0.0
    %2769 = vmatprep.subr.mxu0 0.0
    %2770 = vmatpush1.msra.mxu0 0.0
    %2771 = vmatprep.subr.mxu0 0.0
    %2772 = vmatpush1.msra.mxu0 0.0
    %2773 = vmatprep.subr.mxu0 0.0
    %2774 = vmatpush1.msra.mxu0 0.0
    %2775 = vmatprep.subr.mxu0 0.0
    %2776 = vmatpush1.msra.mxu0 0.0
    %2777 = vmatprep.subr.mxu0 0.0
    %2778 = vmatpush1.msra.mxu0 0.0
    %2779 = vmatprep.subr.mxu0 0.0
    %2780 = vmatpush1.msra.mxu0 0.0
    %2781 = vmatprep.subr.mxu0 0.0
    %2782 = vmatpush1.msra.mxu0 0.0
    %2783 = vmatprep.subr.mxu0 0.0
    %2784 = vmatpush1.msra.mxu0 0.0
    %2785 = vmatprep.subr.mxu0 0.0
    %2786 = vmatpush1.msra.mxu0 0.0
    %2787 = vmatprep.subr.mxu0 0.0
    %2788 = vmatpush1.msra.mxu0 0.0
    %2789 = vmatprep.subr.mxu0 0.0
    %2790 = vmatpush1.msra.mxu0 0.0
    %2791 = vmatprep.subr.mxu0 0.0
    %2792 = vmatpush1.msra.mxu0 0.0
    %2793 = vmatprep.subr.mxu0 0.0
    %2794 = vmatpush1.msra.mxu0 0.0
    %2795 = vmatprep.subr.mxu0 0.0
    %2796 = vmatpush1.msra.mxu0 0.0
    %2797 = vmatprep.subr.mxu0 0.0
    %2798 = vmatpush1.msra.mxu0 0.0
    %2799 = vmatprep.subr.mxu0 0.0
    %2800 = vmatpush1.msra.mxu0 0.0
    %2801 = vmatprep.subr.mxu0 0.0
    %2802 = vmatpush1.msra.mxu0 0.0
    %2803 = vmatprep.mubr.f32.mxu0 0.0
    %2804 = vmatmul.mubr.f32.gmra.mrb[0].mxu0 %v2503
    %v2805 = vpop.f32.mrb[0].mxu0
    %v2806 = vadd.f32 %v2494, %v2805
    %v2807 = vpop.f32.mrb[0].mxu0
    %v2808 = vadd.f32 %v2494, %v2807
    %2809 = vmatprep.mubr.f32.mxu0 0.0
    %2810 = vmatmul.mubr.f32.gmra.mrb[0].mxu0 %v2506
    %v2811 = vpop.f32.mrb[0].mxu0
    %v2812 = vadd.f32 %v2499, %v2811
    %v2813 = vpop.f32.mrb[0].mxu0
    %v2814 = vadd.f32 %v2499, %v2813
    %2815 = vdwg.mxu0
    %v2816 = vmax.f32 %v2575, 0.0
    %v2817 = vmax.f32 %v2577, 0.0
    %v2818 = vmax.f32 %v2652, 0.0
    %v2819 = vmax.f32 %v2654, 0.0
    %v2820 = vmax.f32 %v2729, 0.0
    %v2821 = vmax.f32 %v2731, 0.0
    %v2822 = vmax.f32 %v2806, 0.0
    %v2823 = vmax.f32 %v2808, 0.0
    %v2824 = vmax.f32 %v2581, 0.0
    %v2825 = vmax.f32 %v2583, 0.0
    %v2826 = vmax.f32 %v2658, 0.0
    %v2827 = vmax.f32 %v2660, 0.0
    %v2828 = vmax.f32 %v2735, 0.0
    %v2829 = vmax.f32 %v2737, 0.0
    %v2830 = vmax.f32 %v2812, 0.0
    %v2831 = vmax.f32 %v2814, 0.0
    %v2832 = vld [vmem:[%s9] sm:$0x1]
    %v2833 = vld [vmem:[#allocation2] sm:$0x1]
    %2835 = vset.pattern.permute.xlu0 0
    %2836 = vperm.xlu0 %2835, %v2833
    %v2837 = vpop.permute.xlu0 %2836
    %v2839 = vlaneseq
    %v2840 = vshrl.u32 %v2839, 7
    %v2841 = vsub.s32 0, %v2840
    %v2842 = vrot.slane %v2837, %v2841
    %vm2843 = vcmask 130048
    %v2845 = vsel %vm2843, %v2832, 0
    %2847 = vmatprep.subr.mxu0 %v2817
    %2848 = vmatpush1.msra.mxu0 %v2816
    %2849 = vmatprep.subr.mxu0 %v2825
    %2850 = vmatpush1.msra.mxu0 %v2824
    %2851 = vmatprep.subr.mxu0 0.0
    %2852 = vmatpush1.msra.mxu0 0.0
    %2853 = vmatprep.subr.mxu0 0.0
    %2854 = vmatpush1.msra.mxu0 0.0
    %2855 = vmatprep.subr.mxu0 0.0
    %2856 = vmatpush1.msra.mxu0 0.0
    %2857 = vmatprep.subr.mxu0 0.0
    %2858 = vmatpush1.msra.mxu0 0.0
    %2859 = vmatprep.subr.mxu0 0.0
    %2860 = vmatpush1.msra.mxu0 0.0
    %2861 = vmatprep.subr.mxu0 0.0
    %2862 = vmatpush1.msra.mxu0 0.0
    %2863 = vmatprep.subr.mxu0 0.0
    %2864 = vmatpush1.msra.mxu0 0.0
    %2865 = vmatprep.subr.mxu0 0.0
    %2866 = vmatpush1.msra.mxu0 0.0
    %2867 = vmatprep.subr.mxu0 0.0
    %2868 = vmatpush1.msra.mxu0 0.0
    %2869 = vmatprep.subr.mxu0 0.0
    %2870 = vmatpush1.msra.mxu0 0.0
    %2871 = vmatprep.subr.mxu0 0.0
    %2872 = vmatpush1.msra.mxu0 0.0
    %2873 = vmatprep.subr.mxu0 0.0
    %2874 = vmatpush1.msra.mxu0 0.0
    %2875 = vmatprep.subr.mxu0 0.0
    %2876 = vmatpush1.msra.mxu0 0.0
    %2877 = vmatprep.subr.mxu0 0.0
    %2878 = vmatpush1.msra.mxu0 0.0
    %2879 = vmatprep.subr.mxu0 0.0
    %2880 = vmatpush1.msra.mxu0 0.0
    %2881 = vmatprep.subr.mxu0 0.0
    %2882 = vmatpush1.msra.mxu0 0.0
    %2883 = vmatprep.subr.mxu0 0.0
    %2884 = vmatpush1.msra.mxu0 0.0
    %2885 = vmatprep.subr.mxu0 0.0
    %2886 = vmatpush1.msra.mxu0 0.0
    %2887 = vmatprep.subr.mxu0 0.0
    %2888 = vmatpush1.msra.mxu0 0.0
    %2889 = vmatprep.subr.mxu0 0.0
    %2890 = vmatpush1.msra.mxu0 0.0
    %2891 = vmatprep.subr.mxu0 0.0
    %2892 = vmatpush1.msra.mxu0 0.0
    %2893 = vmatprep.subr.mxu0 0.0
    %2894 = vmatpush1.msra.mxu0 0.0
    %2895 = vmatprep.subr.mxu0 0.0
    %2896 = vmatpush1.msra.mxu0 0.0
    %2897 = vmatprep.subr.mxu0 0.0
    %2898 = vmatpush1.msra.mxu0 0.0
    %2899 = vmatprep.subr.mxu0 0.0
    %2900 = vmatpush1.msra.mxu0 0.0
    %2901 = vmatprep.subr.mxu0 0.0
    %2902 = vmatpush1.msra.mxu0 0.0
    %2903 = vmatprep.subr.mxu0 0.0
    %2904 = vmatpush1.msra.mxu0 0.0
    %2905 = vmatprep.subr.mxu0 0.0
    %2906 = vmatpush1.msra.mxu0 0.0
    %2907 = vmatprep.subr.mxu0 0.0
    %2908 = vmatpush1.msra.mxu0 0.0
    %2909 = vmatprep.subr.mxu0 0.0
    %2910 = vmatpush1.msra.mxu0 0.0
    %2911 = vmatprep.mubr.f32.mxu0 0.0
    %2912 = vmatmul.mubr.f32.gmra.mrb[0].mxu0 %v2845
    %v2913 = vpop.f32.mrb[0].mxu0
    %v2914 = vadd.f32 %v2842, %v2913
    %v2915 = vpop.f32.mrb[0].mxu0
    %v2916 = vadd.f32 %v2842, %v2915
    %2917 = vdwg.mxu0
    %2918 = vmatprep.subr.mxu0 %v2819
    %2919 = vmatpush1.msra.mxu0 %v2818
    %2920 = vmatprep.subr.mxu0 %v2827
    %2921 = vmatpush1.msra.mxu0 %v2826
    %2922 = vmatprep.subr.mxu0 0.0
    %2923 = vmatpush1.msra.mxu0 0.0
    %2924 = vmatprep.subr.mxu0 0.0
    %2925 = vmatpush1.msra.mxu0 0.0
    %2926 = vmatprep.subr.mxu0 0.0
    %2927 = vmatpush1.msra.mxu0 0.0
    %2928 = vmatprep.subr.mxu0 0.0
    %2929 = vmatpush1.msra.mxu0 0.0
    %2930 = vmatprep.subr.mxu0 0.0
    %2931 = vmatpush1.msra.mxu0 0.0
    %2932 = vmatprep.subr.mxu0 0.0
    %2933 = vmatpush1.msra.mxu0 0.0
    %2934 = vmatprep.subr.mxu0 0.0
    %2935 = vmatpush1.msra.mxu0 0.0
    %2936 = vmatprep.subr.mxu0 0.0
    %2937 = vmatpush1.msra.mxu0 0.0
    %2938 = vmatprep.subr.mxu0 0.0
    %2939 = vmatpush1.msra.mxu0 0.0
    %2940 = vmatprep.subr.mxu0 0.0
    %2941 = vmatpush1.msra.mxu0 0.0
    %2942 = vmatprep.subr.mxu0 0.0
    %2943 = vmatpush1.msra.mxu0 0.0
    %2944 = vmatprep.subr.mxu0 0.0
    %2945 = vmatpush1.msra.mxu0 0.0
    %2946 = vmatprep.subr.mxu0 0.0
    %2947 = vmatpush1.msra.mxu0 0.0
    %2948 = vmatprep.subr.mxu0 0.0
    %2949 = vmatpush1.msra.mxu0 0.0
    %2950 = vmatprep.subr.mxu0 0.0
    %2951 = vmatpush1.msra.mxu0 0.0
    %2952 = vmatprep.subr.mxu0 0.0
    %2953 = vmatpush1.msra.mxu0 0.0
    %2954 = vmatprep.subr.mxu0 0.0
    %2955 = vmatpush1.msra.mxu0 0.0
    %2956 = vmatprep.subr.mxu0 0.0
    %2957 = vmatpush1.msra.mxu0 0.0
    %2958 = vmatprep.subr.mxu0 0.0
    %2959 = vmatpush1.msra.mxu0 0.0
    %2960 = vmatprep.subr.mxu0 0.0
    %2961 = vmatpush1.msra.mxu0 0.0
    %2962 = vmatprep.subr.mxu0 0.0
    %2963 = vmatpush1.msra.mxu0 0.0
    %2964 = vmatprep.subr.mxu0 0.0
    %2965 = vmatpush1.msra.mxu0 0.0
    %2966 = vmatprep.subr.mxu0 0.0
    %2967 = vmatpush1.msra.mxu0 0.0
    %2968 = vmatprep.subr.mxu0 0.0
    %2969 = vmatpush1.msra.mxu0 0.0
    %2970 = vmatprep.subr.mxu0 0.0
    %2971 = vmatpush1.msra.mxu0 0.0
    %2972 = vmatprep.subr.mxu0 0.0
    %2973 = vmatpush1.msra.mxu0 0.0
    %2974 = vmatprep.subr.mxu0 0.0
    %2975 = vmatpush1.msra.mxu0 0.0
    %2976 = vmatprep.subr.mxu0 0.0
    %2977 = vmatpush1.msra.mxu0 0.0
    %2978 = vmatprep.subr.mxu0 0.0
    %2979 = vmatpush1.msra.mxu0 0.0
    %2980 = vmatprep.subr.mxu0 0.0
    %2981 = vmatpush1.msra.mxu0 0.0
    %2982 = vmatprep.mubr.f32.mxu0 0.0
    %2983 = vmatmul.mubr.f32.gmra.mrb[0].mxu0 %v2845
    %v2984 = vpop.f32.mrb[0].mxu0
    %v2985 = vadd.f32 %v2842, %v2984
    %v2986 = vpop.f32.mrb[0].mxu0
    %v2987 = vadd.f32 %v2842, %v2986
    %2988 = vdwg.mxu0
    %2989 = vmatprep.subr.mxu0 %v2821
    %2990 = vmatpush1.msra.mxu0 %v2820
    %2991 = vmatprep.subr.mxu0 %v2829
    %2992 = vmatpush1.msra.mxu0 %v2828
    %2993 = vmatprep.subr.mxu0 0.0
    %2994 = vmatpush1.msra.mxu0 0.0
    %2995 = vmatprep.subr.mxu0 0.0
    %2996 = vmatpush1.msra.mxu0 0.0
    %2997 = vmatprep.subr.mxu0 0.0
    %2998 = vmatpush1.msra.mxu0 0.0
    %2999 = vmatprep.subr.mxu0 0.0
    %3000 = vmatpush1.msra.mxu0 0.0
    %3001 = vmatprep.subr.mxu0 0.0
    %3002 = vmatpush1.msra.mxu0 0.0
    %3003 = vmatprep.subr.mxu0 0.0
    %3004 = vmatpush1.msra.mxu0 0.0
    %3005 = vmatprep.subr.mxu0 0.0
    %3006 = vmatpush1.msra.mxu0 0.0
    %3007 = vmatprep.subr.mxu0 0.0
    %3008 = vmatpush1.msra.mxu0 0.0
    %3009 = vmatprep.subr.mxu0 0.0
    %3010 = vmatpush1.msra.mxu0 0.0
    %3011 = vmatprep.subr.mxu0 0.0
    %3012 = vmatpush1.msra.mxu0 0.0
    %3013 = vmatprep.subr.mxu0 0.0
    %3014 = vmatpush1.msra.mxu0 0.0
    %3015 = vmatprep.subr.mxu0 0.0
    %3016 = vmatpush1.msra.mxu0 0.0
    %3017 = vmatprep.subr.mxu0 0.0
    %3018 = vmatpush1.msra.mxu0 0.0
    %3019 = vmatprep.subr.mxu0 0.0
    %3020 = vmatpush1.msra.mxu0 0.0
    %3021 = vmatprep.subr.mxu0 0.0
    %3022 = vmatpush1.msra.mxu0 0.0
    %3023 = vmatprep.subr.mxu0 0.0
    %3024 = vmatpush1.msra.mxu0 0.0
    %3025 = vmatprep.subr.mxu0 0.0
    %3026 = vmatpush1.msra.mxu0 0.0
    %3027 = vmatprep.subr.mxu0 0.0
    %3028 = vmatpush1.msra.mxu0 0.0
    %3029 = vmatprep.subr.mxu0 0.0
    %3030 = vmatpush1.msra.mxu0 0.0
    %3031 = vmatprep.subr.mxu0 0.0
    %3032 = vmatpush1.msra.mxu0 0.0
    %3033 = vmatprep.subr.mxu0 0.0
    %3034 = vmatpush1.msra.mxu0 0.0
    %3035 = vmatprep.subr.mxu0 0.0
    %3036 = vmatpush1.msra.mxu0 0.0
    %3037 = vmatprep.subr.mxu0 0.0
    %3038 = vmatpush1.msra.mxu0 0.0
    %3039 = vmatprep.subr.mxu0 0.0
    %3040 = vmatpush1.msra.mxu0 0.0
    %3041 = vmatprep.subr.mxu0 0.0
    %3042 = vmatpush1.msra.mxu0 0.0
    %3043 = vmatprep.subr.mxu0 0.0
    %3044 = vmatpush1.msra.mxu0 0.0
    %3045 = vmatprep.subr.mxu0 0.0
    %3046 = vmatpush1.msra.mxu0 0.0
    %3047 = vmatprep.subr.mxu0 0.0
    %3048 = vmatpush1.msra.mxu0 0.0
    %3049 = vmatprep.subr.mxu0 0.0
    %3050 = vmatpush1.msra.mxu0 0.0
    %3051 = vmatprep.subr.mxu0 0.0
    %3052 = vmatpush1.msra.mxu0 0.0
    %3053 = vmatprep.mubr.f32.mxu0 0.0
    %3054 = vmatmul.mubr.f32.gmra.mrb[0].mxu0 %v2845
    %v3055 = vpop.f32.mrb[0].mxu0
    %v3056 = vadd.f32 %v2842, %v3055
    %v3057 = vpop.f32.mrb[0].mxu0
    %v3058 = vadd.f32 %v2842, %v3057
    %3059 = vdwg.mxu0
    %3060 = vmatprep.subr.mxu0 %v2823
    %3061 = vmatpush1.msra.mxu0 %v2822
    %3062 = vmatprep.subr.mxu0 %v2831
    %3063 = vmatpush1.msra.mxu0 %v2830
    %3064 = vmatprep.subr.mxu0 0.0
    %3065 = vmatpush1.msra.mxu0 0.0
    %3066 = vmatprep.subr.mxu0 0.0
    %3067 = vmatpush1.msra.mxu0 0.0
    %3068 = vmatprep.subr.mxu0 0.0
    %3069 = vmatpush1.msra.mxu0 0.0
    %3070 = vmatprep.subr.mxu0 0.0
    %3071 = vmatpush1.msra.mxu0 0.0
    %3072 = vmatprep.subr.mxu0 0.0
    %3073 = vmatpush1.msra.mxu0 0.0
    %3074 = vmatprep.subr.mxu0 0.0
    %3075 = vmatpush1.msra.mxu0 0.0
    %3076 = vmatprep.subr.mxu0 0.0
    %3077 = vmatpush1.msra.mxu0 0.0
    %3078 = vmatprep.subr.mxu0 0.0
    %3079 = vmatpush1.msra.mxu0 0.0
    %3080 = vmatprep.subr.mxu0 0.0
    %3081 = vmatpush1.msra.mxu0 0.0
    %3082 = vmatprep.subr.mxu0 0.0
    %3083 = vmatpush1.msra.mxu0 0.0
    %3084 = vmatprep.subr.mxu0 0.0
    %3085 = vmatpush1.msra.mxu0 0.0
    %3086 = vmatprep.subr.mxu0 0.0
    %3087 = vmatpush1.msra.mxu0 0.0
    %3088 = vmatprep.subr.mxu0 0.0
    %3089 = vmatpush1.msra.mxu0 0.0
    %3090 = vmatprep.subr.mxu0 0.0
    %3091 = vmatpush1.msra.mxu0 0.0
    %3092 = vmatprep.subr.mxu0 0.0
    %3093 = vmatpush1.msra.mxu0 0.0
    %3094 = vmatprep.subr.mxu0 0.0
    %3095 = vmatpush1.msra.mxu0 0.0
    %3096 = vmatprep.subr.mxu0 0.0
    %3097 = vmatpush1.msra.mxu0 0.0
    %3098 = vmatprep.subr.mxu0 0.0
    %3099 = vmatpush1.msra.mxu0 0.0
    %3100 = vmatprep.subr.mxu0 0.0
    %3101 = vmatpush1.msra.mxu0 0.0
    %3102 = vmatprep.subr.mxu0 0.0
    %3103 = vmatpush1.msra.mxu0 0.0
    %3104 = vmatprep.subr.mxu0 0.0
    %3105 = vmatpush1.msra.mxu0 0.0
    %3106 = vmatprep.subr.mxu0 0.0
    %3107 = vmatpush1.msra.mxu0 0.0
    %3108 = vmatprep.subr.mxu0 0.0
    %3109 = vmatpush1.msra.mxu0 0.0
    %3110 = vmatprep.subr.mxu0 0.0
    %3111 = vmatpush1.msra.mxu0 0.0
    %3112 = vmatprep.subr.mxu0 0.0
    %3113 = vmatpush1.msra.mxu0 0.0
    %3114 = vmatprep.subr.mxu0 0.0
    %3115 = vmatpush1.msra.mxu0 0.0
    %3116 = vmatprep.subr.mxu0 0.0
    %3117 = vmatpush1.msra.mxu0 0.0
    %3118 = vmatprep.subr.mxu0 0.0
    %3119 = vmatpush1.msra.mxu0 0.0
    %3120 = vmatprep.subr.mxu0 0.0
    %3121 = vmatpush1.msra.mxu0 0.0
    %3122 = vmatprep.subr.mxu0 0.0
    %3123 = vmatpush1.msra.mxu0 0.0
    %3124 = vmatprep.mubr.f32.mxu0 0.0
    %3125 = vmatmul.mubr.f32.gmra.mrb[0].mxu0 %v2845
    %v3126 = vpop.f32.mrb[0].mxu0
    %v3127 = vadd.f32 %v2842, %v3126
    %v3128 = vpop.f32.mrb[0].mxu0
    %v3129 = vadd.f32 %v2842, %v3128
    %3130 = vdwg.mxu0
    %v3139 = vcombine.low %v2914, %v2916
    %v3140 = vcombine.low %v2985, %v2987
    %v3141 = vcombine.low %v3056, %v3058
    %v3142 = vcombine.low %v3127, %v3129
    %v3144 = vunpack.c.l.s4 1966171168
    %v3145 = vunpack.c.0.s8 %v3144
    %v3146 = vlaneseq
    %v3147 = vshrl.u32 %v3146, 7
    %v3148 = vsub.s32 %v3145, %v3147
    %v3149 = vrot.slane %v3139, %v3148
    %v3151 = vunpack.c.l.s4 1966171168
    %v3152 = vunpack.c.0.s8 %v3151
    %v3153 = vlaneseq
    %v3154 = vshrl.u32 %v3153, 7
    %v3155 = vsub.s32 %v3152, %v3154
    %v3156 = vrot.slane %v3140, %v3155
    %v3158 = vunpack.c.l.s4 1966171168
    %v3159 = vunpack.c.0.s8 %v3158
    %v3160 = vlaneseq
    %v3161 = vshrl.u32 %v3160, 7
    %v3162 = vsub.s32 %v3159, %v3161
    %v3163 = vrot.slane %v3141, %v3162
    %v3165 = vunpack.c.l.s4 1966171168
    %v3166 = vunpack.c.0.s8 %v3165
    %v3167 = vlaneseq
    %v3168 = vshrl.u32 %v3167, 7
    %v3169 = vsub.s32 %v3166, %v3168
    %v3170 = vrot.slane %v3142, %v3169
    %v3171 = vcombine.low %v3149, %v3156
    %v3172 = vcombine.low %v3163, %v3170
    %v3174 = vunpack.c.l.s4 1966171168
    %v3175 = vunpack.c.0.s8 %v3174
    %v3176 = vlaneseq
    %v3177 = vshrl.u32 %v3176, 7
    %v3178 = vsub.s32 %v3175, %v3177
    %v3179 = vrot.slane %v3171, %v3178
    %v3181 = vunpack.c.l.s4 1966171168
    %v3182 = vunpack.c.0.s8 %v3181
    %v3183 = vlaneseq
    %v3184 = vshrl.u32 %v3183, 7
    %v3185 = vsub.s32 %v3182, %v3184
    %v3186 = vrot.slane %v3172, %v3185
    %v3187 = vcombine.low %v3179, %v3186
    %3189 = vst [vmem:[#allocation3] sm:$0xff] %v3187
    // Predicated region
    $region46: #{tpu_custom_call.1} parent=1 // pred_check
      _
    $region47: #{tpu_custom_call.1} parent=1 // pred_check_branch
      %3191 = sbr.rel (0) target = $region49
    $region48: #{tpu_custom_call.1} parent=1 // pred_region
      %s3193 = ssub.s32 128, 128
      %3194 = vsyncadd [#allocation4], %s3193
      %s3196 = sshll.u32 [#allocation3], 4
      %s3197 = int_to_ptr.vmem [resolvable:$true] %s3196
      %3199 = dma.vmem_to_hbm [thread:$0]  %s3197, 128, %s11, [#allocation4]
    $region49: #{tpu_custom_call.1} parent=1 // pred_fallthru
      _
    // Predicated region
    $region50: #{tpu_custom_call.1} parent=1 // pred_check
      _
    $region51: #{tpu_custom_call.1} parent=1 // pred_check_branch
      %3201 = sbr.rel (0) target = $region53
    $region52: #{tpu_custom_call.1} parent=1 // pred_region
      %3202 = dma.done [#allocation4], 128
    $region53: #{tpu_custom_call.1} parent=1 // pred_fallthru
      _
    %3203 = vsyncpa [#allocation4], 1

</llo_original>
